<compile_context>
chip_gen: v7x
topology: tpu7x:2x2x1
jax: 0.10.0
libtpu: 0.0.40
codegen_flags: <defaults>
</compile_context>

<pallas_src>
import functools

import jax
import jax.numpy as jnp
from jax.experimental import pallas as pl
from jax.experimental.pallas import tpu as pltpu


def _round_up(v, m):
    return (v + m - 1) // m * m


# ---------------------------------------------------------------------------
# Pallas kernels
# ---------------------------------------------------------------------------
def _conv_stats_kernel(pT_ref, wT_ref, y_ref, sum_ref, sq_ref, acc_ref):
    """Fused conv-as-matmul + per-channel partial sum / sum-of-squares.

    pT_ref : (1, tk, tm)    bf16 -- transposed im2col patch tile (K-major rows)
    wT_ref : (C8, tk)       bf16 -- conv weight tile, (out-channel, K)
    y_ref  : (1, C8, tm)    bf16 -- conv output tile (resident across K steps)
    sum_ref, sq_ref: (1, 1, C8, 1) f32 -- per-(batch, spatial-tile) partials
    acc_ref: (C8, tm)       f32  -- VMEM accumulator across the K grid axis
    """
    k = pl.program_id(2)

    @pl.when(k == 0)
    def _():
        acc_ref[...] = jnp.zeros_like(acc_ref)

    # (C8, tk) @ (tk, tm) on the MXU, f32 accumulation.
    acc_ref[...] += jnp.dot(wT_ref[...], pT_ref[0],
                            preferred_element_type=jnp.float32)

    @pl.when(k == pl.num_programs(2) - 1)
    def _():
        acc = acc_ref[...]                                    # (C8, tm) f32
        y_ref[0] = acc.astype(y_ref.dtype)                    # bf16 intermediate
        sum_ref[0, 0] = jnp.sum(acc, axis=1, keepdims=True)   # (C8, 1)
        sq_ref[0, 0] = jnp.sum(acc * acc, axis=1, keepdims=True)


def _bn_relu_kernel(y_ref, scale_ref, bias_ref, o_ref):
    """Fused affine-normalize + ReLU; channel axis is the sublane axis.

    y_ref: (1, C8, tm_bn) bf16; scale/bias: (Cout, 1) f32; o_ref: (1, Cout, tm_bn) f32.
    """
    c = o_ref.shape[1]
    y = y_ref[0].astype(jnp.float32)[:c, :]
    o_ref[0] = jnp.maximum(y * scale_ref[...] + bias_ref[...], 0.0)


# ---------------------------------------------------------------------------
# Pallas wrappers
# ---------------------------------------------------------------------------
def _pallas_conv_stats(pT, wT, tm, tk):
    N, Kp, Sp = pT.shape
    C8 = wT.shape[0]
    T = Sp // tm
    KT = Kp // tk
    return pl.pallas_call(
        _conv_stats_kernel,
        out_shape=(jax.ShapeDtypeStruct((N, C8, Sp), jnp.bfloat16),
                   jax.ShapeDtypeStruct((N, T, C8, 1), jnp.float32),
                   jax.ShapeDtypeStruct((N, T, C8, 1), jnp.float32)),
        grid_spec=pltpu.PrefetchScalarGridSpec(
            num_scalar_prefetch=0,
            grid=(N, T, KT),
            in_specs=[
                pl.BlockSpec((1, tk, tm), lambda n, i, k: (n, k, i)),
                pl.BlockSpec((C8, tk), lambda n, i, k: (0, k)),
            ],
            out_specs=[
                pl.BlockSpec((1, C8, tm), lambda n, i, k: (n, 0, i)),
                pl.BlockSpec((1, 1, C8, 1), lambda n, i, k: (n, i, 0, 0)),
                pl.BlockSpec((1, 1, C8, 1), lambda n, i, k: (n, i, 0, 0)),
            ],
            scratch_shapes=[pltpu.VMEM((C8, tm), jnp.float32)],
        ),
        compiler_params=pltpu.CompilerParams(
            dimension_semantics=("parallel", "parallel", "arbitrary"),
            vmem_limit_bytes=32 * 1024 * 1024),
    )(pT, wT)


def _pallas_bn_relu(y, scale, bias, s_out, tm_bn):
    N, C8, Sp = y.shape
    Cout = scale.shape[0]
    T = pl.cdiv(s_out, tm_bn)
    return pl.pallas_call(
        _bn_relu_kernel,
        out_shape=jax.ShapeDtypeStruct((N, Cout, s_out), jnp.float32),
        grid_spec=pltpu.PrefetchScalarGridSpec(
            num_scalar_prefetch=0,
            grid=(N, T),
            in_specs=[
                pl.BlockSpec((1, C8, tm_bn), lambda n, i: (n, 0, i)),
                pl.BlockSpec((Cout, 1), lambda n, i: (0, 0)),
                pl.BlockSpec((Cout, 1), lambda n, i: (0, 0)),
            ],
            out_specs=pl.BlockSpec((1, Cout, tm_bn), lambda n, i: (n, 0, i)),
        ),
        compiler_params=pltpu.CompilerParams(
            dimension_semantics=("parallel", "parallel"),
            vmem_limit_bytes=32 * 1024 * 1024),
    )(y, scale, bias)


# ---------------------------------------------------------------------------
# im2col (XLA glue, produces transposed patches (N, Kp, Sp) in ONE materialization)
# ---------------------------------------------------------------------------
def _im2col_T(x, kernel_size, stride, padding, out_dims, k_extra, s_pad):
    """x: (N, C, D, H, W) bf16 -> (N, K + k_extra, S + s_pad).
    K = kD*kH*kW*C (tap-major, channel-minor), S = Dout*Hout*Wout (row-major)."""
    kD, kH, kW = kernel_size
    sD, sH, sW = stride
    pD, pH, pW = padding
    Dout, Hout, Wout = out_dims
    N, C = x.shape[0], x.shape[1]
    S = Dout * Hout * Wout

    xp = jnp.pad(x, ((0, 0), (0, 0), (pD, pD), (pH, pH), (pW, pW)))
    taps = []
    for kd in range(kD):
        for kh in range(kH):
            for kw in range(kW):
                sl = xp[:, :,
                        kd:kd + (Dout - 1) * sD + 1:sD,
                        kh:kh + (Hout - 1) * sH + 1:sH,
                        kw:kw + (Wout - 1) * sW + 1:sW]       # (N, C, Do, Ho, Wo)
                taps.append(sl.reshape(N, C, S))
    if k_extra:
        taps.append(jnp.zeros((N, k_extra, S), x.dtype))
    pT = jnp.concatenate(taps, axis=1)                        # (N, Kp, S)
    if s_pad:
        pT = jnp.pad(pT, ((0, 0), (0, 0), (0, s_pad)))
    return pT


# ---------------------------------------------------------------------------
# BasicConv3d forward
# ---------------------------------------------------------------------------
@functools.partial(jax.jit,
                   static_argnames=("kernel_size", "stride", "padding",
                                    "tm_max", "tk_max", "bn_tile_max"))
def basic_conv3d_forward(x, conv_weight, bn_gamma, bn_beta,
                         kernel_size, stride, padding, eps=1e-3,
                         tm_max=1024, tk_max=512, bn_tile_max=32768):
    """x: (N, Cin, D, H, W); conv_weight: (Cout, Cin, kD, kH, kW).
    Returns (N, Cout, Dout, Hout, Wout), matching the PyTorch module forward in
    training mode (BatchNorm3d normalizes with current-batch biased stats)."""
    kernel_size = (kernel_size,) * 3 if isinstance(kernel_size, int) else tuple(kernel_size)
    stride = (stride,) * 3 if isinstance(stride, int) else tuple(stride)
    padding = (padding,) * 3 if isinstance(padding, int) else tuple(padding)

    N, Cin, D, H, W = x.shape
    Cout = conv_weight.shape[0]
    kD, kH, kW = kernel_size
    sD, sH, sW = stride
    pD, pH, pW = padding
    K = kD * kH * kW * Cin

    Dout = (D + 2 * pD - kD) // sD + 1
    Hout = (H + 2 * pH - kH) // sH + 1
    Wout = (W + 2 * pW - kW) // sW + 1
    S = Dout * Hout * Wout

    # Tile geometry.  K is tiled (tk) so VMEM use is bounded independent of Cin;
    # Cout is padded to a multiple of 16 (bf16 sublane packing of the
    # intermediate); S is padded to a multiple of the row tile tm.
    Kp0 = _round_up(K, 128)
    KT = pl.cdiv(Kp0, tk_max)
    tk = _round_up(pl.cdiv(Kp0, KT), 128)
    Kp = tk * KT
    C8 = _round_up(Cout, 16)
    tm = min(tm_max, _round_up(S, 128))
    Sp = _round_up(S, tm)

    # im2col in bf16 (half the HBM bytes); K / S padding folded into the build.
    pT = _im2col_T(x.astype(jnp.bfloat16), kernel_size, stride, padding,
                   (Dout, Hout, Wout), Kp - K, Sp - S)

    # (Cout,Cin,kD,kH,kW) -> (Cout,kD,kH,kW,Cin) -> (Cout,K), bf16, padded.
    wT = jnp.transpose(conv_weight, (0, 2, 3, 4, 1)).reshape(Cout, K)
    wT = jnp.pad(wT.astype(jnp.bfloat16), ((0, C8 - Cout), (0, Kp - K)))

    # 1) conv as matmul with fused per-channel batch statistics (Pallas / MXU).
    #    Padded rows/columns/channels are exactly zero (no conv bias), so they
    #    add nothing to the sums; divide by the true count below.
    y, psum, psq = _pallas_conv_stats(pT, wT, tm, tk)

    count = N * S
    csum = jnp.sum(psum[..., 0], axis=(0, 1))            # (C8,)
    csq = jnp.sum(psq[..., 0], axis=(0, 1))              # (C8,)
    mean = (csum / count)[:Cout]
    # biased variance (torch training-mode BN); clamp tiny negative cancellation.
    var = jnp.maximum((csq / count)[:Cout] - mean * mean, 0.0)
    inv_std = jax.lax.rsqrt(var + eps)
    g = bn_gamma.astype(jnp.float32)
    b = bn_beta.astype(jnp.float32)
    scale = (g * inv_std).reshape(Cout, 1)
    bias = (b - mean * g * inv_std).reshape(Cout, 1)

    # 2) fused BN + ReLU (Pallas), big lane-dense tiles, written directly to the
    #    UNPADDED (N, Cout, S) output (no trailing XLA slice copy).
    T_conv = Sp // tm
    grp = 1
    for cand in range(T_conv, 0, -1):                    # largest group of conv
        if T_conv % cand == 0 and cand * tm <= bn_tile_max:   # tiles that still
            grp = cand                                        # divides Sp
            break
    tm_bn = grp * tm

    if tm_bn <= S:
        out = _pallas_bn_relu(y, scale, bias, S, tm_bn)       # exact shape
    else:
        # tiny-S edge case: write padded and slice (rare, cheap).
        out = _pallas_bn_relu(y, scale, bias, Sp, tm_bn)[:, :, :S]

    return out.reshape(N, Cout, Dout, Hout, Wout)


# ---------------------------------------------------------------------------
# Reference (pure JAX) for sanity check
# ---------------------------------------------------------------------------
def _reference(x, w, gamma, beta, stride, padding, eps=1e-3):
    pD, pH, pW = padding
    y = jax.lax.conv_general_dilated(
        x, w, window_strides=stride,
        padding=[(pD, pD), (pH, pH), (pW, pW)],
        dimension_numbers=("NCDHW", "OIDHW", "NCDHW"))
    mean = jnp.mean(y, axis=(0, 2, 3, 4), keepdims=True)
    var = jnp.mean((y - mean) ** 2, axis=(0, 2, 3, 4), keepdims=True)
    yn = (y - mean) * jax.lax.rsqrt(var + eps)
    yn = yn * gamma.reshape(1, -1, 1, 1, 1) + beta.reshape(1, -1, 1, 1, 1)
    return jnp.maximum(yn, 0.0)


if __name__ == "__main__":
    # BasicConv3d(in_planes=4, out_planes=8, kernel_size=3, stride=1, padding=1)
    N, Cin, D, H, W = 2, 4, 8, 16, 16
    Cout = 8
    ks, st, pad = (3, 3, 3), (1, 1, 1), (1, 1, 1)

    key = jax.random.PRNGKey(0)
    kx, kw, kg, kb = jax.random.split(key, 4)
    x = jax.random.normal(kx, (N, Cin, D, H, W), dtype=jnp.float32)
    fan_in = Cin * ks[0] * ks[1] * ks[2]
    bound = (1.0 / fan_in) ** 0.5
    conv_w = jax.random.uniform(kw, (Cout, Cin) + ks, jnp.float32, -bound, bound)
    gamma = 1.0 + 0.1 * jax.random.normal(kg, (Cout,), jnp.float32)
    beta = 0.1 * jax.random.normal(kb, (Cout,), jnp.float32)

    out = basic_conv3d_forward(x, conv_w, gamma, beta, ks, st, pad)
    out = jax.block_until_ready(out)
    assert out.shape == (N, Cout, D, H, W), out.shape

    # The kernel feeds the MXU bf16 operands (f32 accumulation) and stores the
    # conv intermediate in bf16 (stats stay f32), so round the reference conv
    # inputs to bf16 as well and compare with a tolerance that covers the
    # ~2^-9 relative rounding the bf16 intermediate adds before normalization.
    x_r = x.astype(jnp.bfloat16).astype(jnp.float32)
    w_r = conv_w.astype(jnp.bfloat16).astype(jnp.float32)
    ref = _reference(x_r, w_r, gamma, beta, st, pad)
    max_err = float(jnp.max(jnp.abs(out - ref)))
    assert jnp.allclose(out, ref, atol=3e-2, rtol=3e-2), max_err

    print("KERNEL_OK")
</pallas_src>

<mosaic_0001>
module attributes {stable_mosaic.version = 11 : i64} {
  func.func @_conv_stats_kernel(%arg0: i32, %arg1: i32, %arg2: i32, %arg3: memref<1x128x1024xbf16, #tpu.memory_space<vmem>>, %arg4: memref<16x128xbf16, #tpu.memory_space<vmem>>, %arg5: memref<1x16x1024xbf16, #tpu.memory_space<vmem>>, %arg6: memref<1x1x16x1xf32, #tpu.memory_space<vmem>>, %arg7: memref<1x1x16x1xf32, #tpu.memory_space<vmem>>, %arg8: memref<16x1024xf32, #tpu.memory_space<vmem>>) attributes {dimension_semantics = [#tpu.dimension_semantics<parallel>, #tpu.dimension_semantics<parallel>, #tpu.dimension_semantics<arbitrary>], iteration_bounds = array<i64: 2, 2, 1>, scalar_prefetch = 0 : i64, scratch_operands = 1 : i64, tpu.core_type = #tpu.core_type<tc>, window_params = [{transform_indices = @transform_0, window_bounds = array<i64: 1, 128, 1024>}, {transform_indices = @transform_1, window_bounds = array<i64: 16, 128>}, {transform_indices = @transform_2, window_bounds = array<i64: 1, 16, 1024>}, {transform_indices = @transform_3, window_bounds = array<i64: 1, 1, 16, 1>}, {transform_indices = @transform_4, window_bounds = array<i64: 1, 1, 16, 1>}]} {
    %c0_i32 = arith.constant 0 : i32
    %0 = arith.cmpi eq, %arg2, %c0_i32 : i32
    %1 = arith.extui %0 : i1 to i32
    %c0_i32_0 = arith.constant 0 : i32
    %2 = arith.cmpi ne, %1, %c0_i32_0 : i32
    scf.if %2 {
      %cst_11 = arith.constant 0.000000e+00 : f32
      %13 = vector.broadcast %cst_11 : f32 to vector<16x1024xf32>
      %c0_12 = arith.constant 0 : index
      %c0_13 = arith.constant 0 : index
      %14 = vector.load %arg8[%c0_12, %c0_13] : memref<16x1024xf32, #tpu.memory_space<vmem>>, vector<16x1024xf32>
      tpu.vector_store %arg8[%c0_12, %c0_13], %13 {strides = array<i32>} : memref<16x1024xf32, #tpu.memory_space<vmem>>, vector<16x1024xf32>,
    } else {
    }
    %c0 = arith.constant 0 : index
    %c0_1 = arith.constant 0 : index
    %3 = vector.load %arg8[%c0, %c0_1] : memref<16x1024xf32, #tpu.memory_space<vmem>>, vector<16x1024xf32>
    %c0_2 = arith.constant 0 : index
    %c0_3 = arith.constant 0 : index
    %4 = vector.load %arg4[%c0_2, %c0_3] : memref<16x128xbf16, #tpu.memory_space<vmem>>, vector<16x128xbf16>
    %c0_4 = arith.constant 0 : index
    %c0_5 = arith.constant 0 : index
    %c0_6 = arith.constant 0 : index
    %5 = vector.load %arg3[%c0_4, %c0_5, %c0_6] : memref<1x128x1024xbf16, #tpu.memory_space<vmem>>, vector<1x128x1024xbf16>
    %6 = vector.shape_cast %5 : vector<1x128x1024xbf16> to vector<128x1024xbf16>
    %cst = arith.constant dense<0.000000e+00> : vector<16x1024xf32>
    %7 = tpu.matmul %4, %6, %cst {dimension_numbers = #tpu.dot_dimension_numbers<[1], [0], [0], [1], [0, 0, 1, 1], [], []>} : vector<16x128xbf16>, vector<128x1024xbf16>, vector<16x1024xf32> -> vector<16x1024xf32>
    %8 = arith.addf %3, %7 : vector<16x1024xf32>
    %c0_7 = arith.constant 0 : index
    %c0_8 = arith.constant 0 : index
    %9 = vector.load %arg8[%c0_7, %c0_8] : memref<16x1024xf32, #tpu.memory_space<vmem>>, vector<16x1024xf32>
    tpu.vector_store %arg8[%c0_7, %c0_8], %8 {strides = array<i32>} : memref<16x1024xf32, #tpu.memory_space<vmem>>, vector<16x1024xf32>,
    %c0_i32_9 = arith.constant 0 : i32
    %10 = arith.cmpi eq, %arg2, %c0_i32_9 : i32
    %11 = arith.extui %10 : i1 to i32
    %c0_i32_10 = arith.constant 0 : i32
    %12 = arith.cmpi ne, %11, %c0_i32_10 : i32
    scf.if %12 {
      %c0_11 = arith.constant 0 : index
      %c0_12 = arith.constant 0 : index
      %13 = vector.load %arg8[%c0_11, %c0_12] : memref<16x1024xf32, #tpu.memory_space<vmem>>, vector<16x1024xf32>
      %14 = arith.truncf %13 : vector<16x1024xf32> to vector<16x1024xbf16>
      %c0_13 = arith.constant 0 : index
      %c0_14 = arith.constant 0 : index
      %c0_15 = arith.constant 0 : index
      %15 = vector.load %arg5[%c0_13, %c0_14, %c0_15] : memref<1x16x1024xbf16, #tpu.memory_space<vmem>>, vector<1x16x1024xbf16>
      %16 = vector.shape_cast %15 : vector<1x16x1024xbf16> to vector<16x1024xbf16>
      %17 = vector.shape_cast %14 : vector<16x1024xbf16> to vector<1x16x1024xbf16>
      tpu.vector_store %arg5[%c0_13, %c0_14, %c0_15], %17 {strides = array<i32>} : memref<1x16x1024xbf16, #tpu.memory_space<vmem>>, vector<1x16x1024xbf16>,
      %cst_16 = arith.constant dense<0.000000e+00> : vector<16xf32>
      %18 = vector.multi_reduction <add>, %13, %cst_16 [1] : vector<16x1024xf32> to vector<16xf32>
      %19 = vector.shape_cast %18 : vector<16xf32> to vector<16x1xf32>
      %c0_17 = arith.constant 0 : index
      %c0_18 = arith.constant 0 : index
      %c0_19 = arith.constant 0 : index
      %c0_20 = arith.constant 0 : index
      %20 = vector.load %arg6[%c0_17, %c0_18, %c0_19, %c0_20] : memref<1x1x16x1xf32, #tpu.memory_space<vmem>>, vector<1x1x16x1xf32>
      %21 = vector.shape_cast %20 : vector<1x1x16x1xf32> to vector<16x1xf32>
      %22 = vector.shape_cast %19 : vector<16x1xf32> to vector<1x1x16x1xf32>
      tpu.vector_store %arg6[%c0_17, %c0_18, %c0_19, %c0_20], %22 {strides = array<i32>} : memref<1x1x16x1xf32, #tpu.memory_space<vmem>>, vector<1x1x16x1xf32>,
      %23 = arith.mulf %13, %13 : vector<16x1024xf32>
      %cst_21 = arith.constant dense<0.000000e+00> : vector<16xf32>
      %24 = vector.multi_reduction <add>, %23, %cst_21 [1] : vector<16x1024xf32> to vector<16xf32>
      %25 = vector.shape_cast %24 : vector<16xf32> to vector<16x1xf32>
      %c0_22 = arith.constant 0 : index
      %c0_23 = arith.constant 0 : index
      %c0_24 = arith.constant 0 : index
      %c0_25 = arith.constant 0 : index
      %26 = vector.load %arg7[%c0_22, %c0_23, %c0_24, %c0_25] : memref<1x1x16x1xf32, #tpu.memory_space<vmem>>, vector<1x1x16x1xf32>
      %27 = vector.shape_cast %26 : vector<1x1x16x1xf32> to vector<16x1xf32>
      %28 = vector.shape_cast %25 : vector<16x1xf32> to vector<1x1x16x1xf32>
      tpu.vector_store %arg7[%c0_22, %c0_23, %c0_24, %c0_25], %28 {strides = array<i32>} : memref<1x1x16x1xf32, #tpu.memory_space<vmem>>, vector<1x1x16x1xf32>,
    } else {
    }
    return
  }
  func.func @transform_0(%arg0: i32, %arg1: i32, %arg2: i32) -> (i32, i32, i32) {
    %c0_i32 = arith.constant 0 : i32
    return %arg0, %arg2, %arg1 : i32, i32, i32
  }
  func.func @transform_1(%arg0: i32, %arg1: i32, %arg2: i32) -> (i32, i32) {
    %c0_i32 = arith.constant 0 : i32
    %c0_i32_0 = arith.constant 0 : i32
    return %c0_i32, %arg2 : i32, i32
  }
  func.func @transform_2(%arg0: i32, %arg1: i32, %arg2: i32) -> (i32, i32, i32) {
    %c0_i32 = arith.constant 0 : i32
    %c0_i32_0 = arith.constant 0 : i32
    return %arg0, %c0_i32, %arg1 : i32, i32, i32
  }
  func.func @transform_3(%arg0: i32, %arg1: i32, %arg2: i32) -> (i32, i32, i32, i32) {
    %c0_i32 = arith.constant 0 : i32
    %c0_i32_0 = arith.constant 0 : i32
    %c0_i32_1 = arith.constant 0 : i32
    return %arg0, %arg1, %c0_i32, %c0_i32_0 : i32, i32, i32, i32
  }
  func.func @transform_4(%arg0: i32, %arg1: i32, %arg2: i32) -> (i32, i32, i32, i32) {
    %c0_i32 = arith.constant 0 : i32
    %c0_i32_0 = arith.constant 0 : i32
    %c0_i32_1 = arith.constant 0 : i32
    return %arg0, %arg1, %c0_i32, %c0_i32_0 : i32, i32, i32, i32
  }
}

module attributes {stable_mosaic.version = 11 : i64} {
  func.func @_bn_relu_kernel(%arg0: i32, %arg1: i32, %arg2: memref<1x16x2048xbf16, #tpu.memory_space<vmem>>, %arg3: memref<8x1xf32, #tpu.memory_space<vmem>>, %arg4: memref<8x1xf32, #tpu.memory_space<vmem>>, %arg5: memref<1x8x2048xf32, #tpu.memory_space<vmem>>) attributes {dimension_semantics = [#tpu.dimension_semantics<parallel>, #tpu.dimension_semantics<parallel>], iteration_bounds = array<i64: 2, 1>, scalar_prefetch = 0 : i64, scratch_operands = 0 : i64, tpu.core_type = #tpu.core_type<tc>, window_params = [{transform_indices = @transform_0, window_bounds = array<i64: 1, 16, 2048>}, {pipeline_mode = #tpu.pipeline_mode<synchronous>, transform_indices = @transform_1, window_bounds = array<i64: 8, 1>}, {pipeline_mode = #tpu.pipeline_mode<synchronous>, transform_indices = @transform_2, window_bounds = array<i64: 8, 1>}, {transform_indices = @transform_3, window_bounds = array<i64: 1, 8, 2048>}]} {
    %c0 = arith.constant 0 : index
    %c0_0 = arith.constant 0 : index
    %c0_1 = arith.constant 0 : index
    %0 = vector.load %arg2[%c0, %c0_0, %c0_1] : memref<1x16x2048xbf16, #tpu.memory_space<vmem>>, vector<1x16x2048xbf16>
    %1 = vector.shape_cast %0 : vector<1x16x2048xbf16> to vector<16x2048xbf16>
    %2 = arith.extf %1 : vector<16x2048xbf16> to vector<16x2048xf32>
    %3 = vector.extract_strided_slice %2 {offsets = [0, 0], sizes = [8, 2048], strides = [1, 1]} : vector<16x2048xf32> to vector<8x2048xf32>
    %c0_2 = arith.constant 0 : index
    %c0_3 = arith.constant 0 : index
    %4 = vector.load %arg3[%c0_2, %c0_3] : memref<8x1xf32, #tpu.memory_space<vmem>>, vector<8x1xf32>
    %5 = vector.broadcast %4 : vector<8x1xf32> to vector<8x2048xf32>
    %6 = arith.mulf %3, %5 : vector<8x2048xf32>
    %c0_4 = arith.constant 0 : index
    %c0_5 = arith.constant 0 : index
    %7 = vector.load %arg4[%c0_4, %c0_5] : memref<8x1xf32, #tpu.memory_space<vmem>>, vector<8x1xf32>
    %8 = vector.broadcast %7 : vector<8x1xf32> to vector<8x2048xf32>
    %9 = arith.addf %6, %8 : vector<8x2048xf32>
    %cst = arith.constant 0.000000e+00 : f32
    %10 = vector.broadcast %cst : f32 to vector<8x2048xf32>
    %11 = arith.maximumf %9, %10 : vector<8x2048xf32>
    %c0_6 = arith.constant 0 : index
    %c0_7 = arith.constant 0 : index
    %c0_8 = arith.constant 0 : index
    %12 = vector.load %arg5[%c0_6, %c0_7, %c0_8] : memref<1x8x2048xf32, #tpu.memory_space<vmem>>, vector<1x8x2048xf32>
    %13 = vector.shape_cast %12 : vector<1x8x2048xf32> to vector<8x2048xf32>
    %14 = vector.shape_cast %11 : vector<8x2048xf32> to vector<1x8x2048xf32>
    tpu.vector_store %arg5[%c0_6, %c0_7, %c0_8], %14 {strides = array<i32>} : memref<1x8x2048xf32, #tpu.memory_space<vmem>>, vector<1x8x2048xf32>,
    return
  }
  func.func @transform_0(%arg0: i32, %arg1: i32) -> (i32, i32, i32) {
    %c0_i32 = arith.constant 0 : i32
    %c0_i32_0 = arith.constant 0 : i32
    return %arg0, %c0_i32, %arg1 : i32, i32, i32
  }
  func.func @transform_1(%arg0: i32, %arg1: i32) -> (i32, i32) {
    %c0_i32 = arith.constant 0 : i32
    %c0_i32_0 = arith.constant 0 : i32
    %c0_i32_1 = arith.constant 0 : i32
    return %c0_i32, %c0_i32_0 : i32, i32
  }
  func.func @transform_2(%arg0: i32, %arg1: i32) -> (i32, i32) {
    %c0_i32 = arith.constant 0 : i32
    %c0_i32_0 = arith.constant 0 : i32
    %c0_i32_1 = arith.constant 0 : i32
    return %c0_i32, %c0_i32_0 : i32, i32
  }
  func.func @transform_3(%arg0: i32, %arg1: i32) -> (i32, i32, i32) {
    %c0_i32 = arith.constant 0 : i32
    %c0_i32_0 = arith.constant 0 : i32
    return %arg0, %c0_i32, %arg1 : i32, i32, i32
  }
}

</mosaic_0001>

<llo_original>
// kernel: basic_conv3d_forward.2
$region0: #{basic_conv3d_forward.2}
  #allocation0 [shape = 'u32[]', space=smem, size = 0x4, offset = 0x4, fixed_abs, tag = 'smem constant byte address 0x4 - core index']
  #allocation1 [shape = 'u32[144,128]{1,0:T(1,128)}', space=vmem, size = 0x12000, scoped, tag = 'internal scratch']
  #allocation2 [shape = 'f32[16,1024]{1,0:T(8,128)}', space=vmem, size = 0x10000, scoped, tag = 'scratch operand']
  %s0 = inlined_call_operand.vmem [shape: bf16[2,128,2048], index: 0, kind: input, shape index: {}]
  %s1 = inlined_call_operand.vmem [shape: bf16[16,128], index: 1, kind: input, shape index: {}]
  %s2 = inlined_call_operand.vmem [shape: bf16[2,16,2048], index: 2, kind: output, shape index: {0}]
  %s3 = inlined_call_operand.vmem [shape: f32[2,2,16,1], index: 3, kind: output, shape index: {1}]
  %s4 = inlined_call_operand.vmem [shape: f32[2,2,16,1], index: 4, kind: output, shape index: {2}]
  %5 = xla_tuple %s2, %s3, %s4
  %s6 = sld [smem:[#allocation0]]
  $region107: #{basic_conv3d_forward.2} parent=0
    _
  %s8 = ssub.s32 1, %s6
  %s9 = scalar_select 0, %s8, %s6
  $region1: #{basic_conv3d_forward.2} parent=0
    #allocation3 [shape = 'u8[524288]{0}', space=vmem, size = 0x80000, scoped, tag = 'input window, operand 0']
    #allocation4 [shape = 'u8[65536]{0}', space=vmem, size = 0x10000, scoped, tag = 'output window, operand 0']
    loop: start=0, step=1, limit=6
    $region2: #{basic_conv3d_forward.2} parent=1 // loop_pre_header
      _
    $region3: #{basic_conv3d_forward.2} parent=1 // loop_header
      %s11 = sphi 0, %s15
      %p12 = scmp.ge.s32.totalorder %s11, 6
      %s18 = sphi 0, %s37
      %s19 = sphi 0, %s33
      %s20 = sphi 0, %s29
      %s21 = sphi 0, %s18
      %s22 = sphi 0, %s19
      %s23 = sphi 0, %s20
      %s24 = sphi 0, %s21
      %s25 = sphi 0, %s22
      %s26 = sphi 0, %s23
      %s44 = sphi 0, %s46
      %s47 = sphi 0, %s44
      %s48 = sphi 0, %s47
      %s64 = sphi 0, %s48
      %s70 = sphi 0, %s72
      %s73 = sphi 0, %s70
      %s74 = sphi 0, %s73
      %s90 = sphi 0, %s74
      %s98 = sphi 0, %s100
      %s101 = sphi 0, %s98
      %s102 = sphi 0, %s101
      %s118 = sphi 0, %s102
      %s126 = sphi 0, %s128
      %s129 = sphi 0, %s126
      %s130 = sphi 0, %s129
      %s146 = sphi 0, %s130
      %s154 = sphi 0, %s156
      %s157 = sphi 0, %s154
      %s158 = sphi 0, %s157
      %s174 = sphi 0, %s158
    $region4: #{basic_conv3d_forward.2} parent=1 // loop_header_branch
      %14 = sbr.rel (%p12) target = $region8
    $region5: #{basic_conv3d_forward.2} parent=1 // loop_body
      %s16 = ssub.s32 %s11, 1
      %s17 = ssub.s32 %s11, 2
      %s27 = sadd.s32 1, %s20
      %p28 = scmp.ge.s32.totalorder %s27, 1
      %s29 = scalar_select %p28, 0, %s27
      %s30 = sadd.s32 1, %s19
      %s31 = scalar_select %p28, %s30, %s19
      %p32 = scmp.ge.s32.totalorder %s31, 2
      %s33 = scalar_select %p32, 0, %s31
      %s34 = sadd.s32 1, %s18
      %s35 = scalar_select %p32, %s34, %s18
      %p36 = scmp.ge.s32.totalorder %s35, 2
      %s37 = scalar_select %p36, 0, %s35
      %s38 = ssub.s32 %s18, %s37
      %s39 = ssub.s32 %s20, %s29
      %s40 = sor.u32 %s38, %s39
      %s41 = ssub.s32 %s19, %s33
      %s42 = sor.u32 %s40, %s41
      %p43 = scmp.eq.s32.totalorder %s42, 0
      %s45 = sadd.s32 %s44, 1
      %s46 = scalar_select %p43, %s44, %s45
      %p49 = pneg %p43
      %p50 = scmp.eq.s32.totalorder %s11, 3
      %p51 = por %p49, %p50
      %p52 = scmp.ne.s32.totalorder %s44, %s47
      %p53 = scmp.eq.s32.totalorder %s11, 0
      %p54 = por %p52, %p53
      %p55 = scmp.ne.s32.totalorder %s44, %s47
      %p56 = scmp.eq.s32.totalorder %s16, 3
      %p57 = por %p55, %p56
      %p58 = scmp.ne.s32.totalorder %s47, %s48
      %p59 = scmp.eq.s32.totalorder %s16, 0
      %p60 = por %p58, %p59
      %p61 = scmp.ne.s32.totalorder %s47, %s48
      %p62 = scmp.eq.s32.totalorder %s17, 3
      %p63 = por %p61, %p62
      %p65 = scmp.ne.s32.totalorder %s48, %s64
      %p66 = scmp.eq.s32.totalorder %s17, 0
      %p67 = por %p65, %p66
      %s68 = ssub.s32 %s20, %s29
      %p69 = scmp.eq.s32.totalorder %s68, 0
      %s71 = sadd.s32 %s70, 1
      %s72 = scalar_select %p69, %s70, %s71
      %p75 = pneg %p69
      %p76 = scmp.eq.s32.totalorder %s11, 3
      %p77 = por %p75, %p76
      %p78 = scmp.ne.s32.totalorder %s70, %s73
      %p79 = scmp.eq.s32.totalorder %s11, 0
      %p80 = por %p78, %p79
      %p81 = scmp.ne.s32.totalorder %s70, %s73
      %p82 = scmp.eq.s32.totalorder %s16, 3
      %p83 = por %p81, %p82
      %p84 = scmp.ne.s32.totalorder %s73, %s74
      %p85 = scmp.eq.s32.totalorder %s16, 0
      %p86 = por %p84, %p85
      %p87 = scmp.ne.s32.totalorder %s73, %s74
      %p88 = scmp.eq.s32.totalorder %s17, 3
      %p89 = por %p87, %p88
      %p91 = scmp.ne.s32.totalorder %s74, %s90
      %p92 = scmp.eq.s32.totalorder %s17, 0
      %p93 = por %p91, %p92
      %s94 = ssub.s32 %s18, %s37
      %s95 = ssub.s32 %s19, %s33
      %s96 = sor.u32 %s94, %s95
      %p97 = scmp.eq.s32.totalorder %s96, 0
      %s99 = sadd.s32 %s98, 1
      %s100 = scalar_select %p97, %s98, %s99
      %p103 = pneg %p97
      %p104 = scmp.eq.s32.totalorder %s11, 3
      %p105 = por %p103, %p104
      %p106 = scmp.ne.s32.totalorder %s98, %s101
      %p107 = scmp.eq.s32.totalorder %s11, 0
      %p108 = por %p106, %p107
      %p109 = scmp.ne.s32.totalorder %s98, %s101
      %p110 = scmp.eq.s32.totalorder %s16, 3
      %p111 = por %p109, %p110
      %p112 = scmp.ne.s32.totalorder %s101, %s102
      %p113 = scmp.eq.s32.totalorder %s16, 0
      %p114 = por %p112, %p113
      %p115 = scmp.ne.s32.totalorder %s101, %s102
      %p116 = scmp.eq.s32.totalorder %s17, 3
      %p117 = por %p115, %p116
      %p119 = scmp.ne.s32.totalorder %s102, %s118
      %p120 = scmp.eq.s32.totalorder %s17, 0
      %p121 = por %p119, %p120
      %s122 = ssub.s32 %s18, %s37
      %s123 = ssub.s32 %s19, %s33
      %s124 = sor.u32 %s122, %s123
      %p125 = scmp.eq.s32.totalorder %s124, 0
      %s127 = sadd.s32 %s126, 1
      %s128 = scalar_select %p125, %s126, %s127
      %p131 = pneg %p125
      %p132 = scmp.eq.s32.totalorder %s11, 3
      %p133 = por %p131, %p132
      %p134 = scmp.ne.s32.totalorder %s126, %s129
      %p135 = scmp.eq.s32.totalorder %s11, 0
      %p136 = por %p134, %p135
      %p137 = scmp.ne.s32.totalorder %s126, %s129
      %p138 = scmp.eq.s32.totalorder %s16, 3
      %p139 = por %p137, %p138
      %p140 = scmp.ne.s32.totalorder %s129, %s130
      %p141 = scmp.eq.s32.totalorder %s16, 0
      %p142 = por %p140, %p141
      %p143 = scmp.ne.s32.totalorder %s129, %s130
      %p144 = scmp.eq.s32.totalorder %s17, 3
      %p145 = por %p143, %p144
      %p147 = scmp.ne.s32.totalorder %s130, %s146
      %p148 = scmp.eq.s32.totalorder %s17, 0
      %p149 = por %p147, %p148
      %s150 = ssub.s32 %s18, %s37
      %s151 = ssub.s32 %s19, %s33
      %s152 = sor.u32 %s150, %s151
      %p153 = scmp.eq.s32.totalorder %s152, 0
      %s155 = sadd.s32 %s154, 1
      %s156 = scalar_select %p153, %s154, %s155
      %p159 = pneg %p153
      %p160 = scmp.eq.s32.totalorder %s11, 3
      %p161 = por %p159, %p160
      %p162 = scmp.ne.s32.totalorder %s154, %s157
      %p163 = scmp.eq.s32.totalorder %s11, 0
      %p164 = por %p162, %p163
      %p165 = scmp.ne.s32.totalorder %s154, %s157
      %p166 = scmp.eq.s32.totalorder %s16, 3
      %p167 = por %p165, %p166
      %p168 = scmp.ne.s32.totalorder %s157, %s158
      %p169 = scmp.eq.s32.totalorder %s16, 0
      %p170 = por %p168, %p169
      %p171 = scmp.ne.s32.totalorder %s157, %s158
      %p172 = scmp.eq.s32.totalorder %s17, 3
      %p173 = por %p171, %p172
      %p175 = scmp.ne.s32.totalorder %s158, %s174
      %p176 = scmp.eq.s32.totalorder %s17, 0
      %p177 = por %p175, %p176
      %p178 = scmp.le.s32.totalorder 1, %s11
      %p179 = scmp.lt.s32.totalorder %s11, 5
      %p180 = pnand %p178, %p179
      %p181 = pneg %p180
      // Predicated region
      $region9: #{basic_conv3d_forward.2} parent=5 // pred_check
        _
      $region10: #{basic_conv3d_forward.2} parent=5 // pred_check_branch
        %183 = sbr.rel (%p180) target = $region12
      $region11: #{basic_conv3d_forward.2} parent=5 // pred_region
        %s184 = ssub.s32 %s11, 1
        // Predicated region
        $region13: #{basic_conv3d_forward.2} parent=11 // pred_check
          %p185 = pneg %p86
        $region14: #{basic_conv3d_forward.2} parent=11 // pred_check_branch
          %187 = sbr.rel (%p185) target = $region16
        $region15: #{basic_conv3d_forward.2} parent=11 // pred_region
          %p188 = scmp.lt.s32.totalorder %s23, 0
          %s189 = scalar_select %p188, %s23, 0
          %s190 = smul.addr %s189, 4
          %s191 = scalar_lea.vmem %s1, %s190
        $region16: #{basic_conv3d_forward.2} parent=11 // pred_fallthru
          _
      $region12: #{basic_conv3d_forward.2} parent=5 // pred_fallthru
        _
      %p192 = scmp.lt.s32.totalorder %s11, 4
      // Predicated region
      $region17: #{basic_conv3d_forward.2} parent=5 // pred_check
        %p193 = pneg %p192
      $region18: #{basic_conv3d_forward.2} parent=5 // pred_check_branch
        %195 = sbr.rel (%p193) target = $region20
      $region19: #{basic_conv3d_forward.2} parent=5 // pred_region
        // Predicated region
        $region21: #{basic_conv3d_forward.2} parent=19 // pred_check
          %p196 = pneg %p54
        $region22: #{basic_conv3d_forward.2} parent=19 // pred_check_branch
          %198 = sbr.rel (%p196) target = $region24
        $region23: #{basic_conv3d_forward.2} parent=19 // pred_region
          %s199 = sand.u32 %s44, 1
          %s200 = sand.u32 %s44, 1
          %s201 = smul.addr %s200, 512
          %s202 = scalar_lea.vmem [#allocation3], %s201
          %s203 = smul.u32 16, %s20
          %s204 = smul.u32 8, %s19
          %s205 = smul.addr %s203, 16
          %s206 = sadd.s32 %s204, %s205
          %s207 = smul.addr %s18, 256
          %s208 = sadd.s32 %s206, %s207
          %s209 = smul.addr %s208, 4
          %s210 = scalar_lea.vmem %s0, %s209
          // Predicated region
          $region25: #{basic_conv3d_forward.2} parent=23 // pred_check
            _
          $region26: #{basic_conv3d_forward.2} parent=23 // pred_check_branch
            %212 = sbr.rel (0) target = $region28
          $region27: #{basic_conv3d_forward.2} parent=23 // pred_region
            // Predicated region
            $region29: #{basic_conv3d_forward.2} parent=27 // pred_check
              _
            $region30: #{basic_conv3d_forward.2} parent=27 // pred_check_branch
              %214 = sbr.rel (0) target = $region32
            $region31: #{basic_conv3d_forward.2} parent=27 // pred_region
              loop: start=0, step=1, limit=1
              $region33: #{basic_conv3d_forward.2} parent=31 // loop_pre_header
                _
              $region34: #{basic_conv3d_forward.2} parent=31 // loop_header
                %s216 = sphi 0, %s220
                %p217 = scmp.ge.s32.totalorder %s216, 1
                %s221 = sphi %s210, %s210
                %s222 = sphi %s202, %s202
              $region35: #{basic_conv3d_forward.2} parent=31 // loop_header_branch
                %219 = sbr.rel (%p217) target = $region39
              $region36: #{basic_conv3d_forward.2} parent=31 // loop_body
                %v223 = vld [vmem:[%s221] sm:$0xff]
                %224 = vst [vmem:[%s222] sm:$0xff] %v223
                %v225 = vld [vmem:[%s221 + $0x8] sm:$0xff]
                %226 = vst [vmem:[%s222 + $0x8] sm:$0xff] %v225
                %v227 = vld [vmem:[%s221 + $0x10] sm:$0xff]
                %228 = vst [vmem:[%s222 + $0x10] sm:$0xff] %v227
                %v229 = vld [vmem:[%s221 + $0x18] sm:$0xff]
                %230 = vst [vmem:[%s222 + $0x18] sm:$0xff] %v229
                %v231 = vld [vmem:[%s221 + $0x40] sm:$0xff]
                %232 = vst [vmem:[%s222 + $0x20] sm:$0xff] %v231
                %v233 = vld [vmem:[%s221 + $0x48] sm:$0xff]
                %234 = vst [vmem:[%s222 + $0x28] sm:$0xff] %v233
                %v235 = vld [vmem:[%s221 + $0x50] sm:$0xff]
                %236 = vst [vmem:[%s222 + $0x30] sm:$0xff] %v235
                %v237 = vld [vmem:[%s221 + $0x58] sm:$0xff]
                %238 = vst [vmem:[%s222 + $0x38] sm:$0xff] %v237
                %v239 = vld [vmem:[%s221 + $0x80] sm:$0xff]
                %240 = vst [vmem:[%s222 + $0x40] sm:$0xff] %v239
                %v241 = vld [vmem:[%s221 + $0x88] sm:$0xff]
                %242 = vst [vmem:[%s222 + $0x48] sm:$0xff] %v241
                %v243 = vld [vmem:[%s221 + $0x90] sm:$0xff]
                %244 = vst [vmem:[%s222 + $0x50] sm:$0xff] %v243
                %v245 = vld [vmem:[%s221 + $0x98] sm:$0xff]
                %246 = vst [vmem:[%s222 + $0x58] sm:$0xff] %v245
                %v247 = vld [vmem:[%s221 + $0xc0] sm:$0xff]
                %248 = vst [vmem:[%s222 + $0x60] sm:$0xff] %v247
                %v249 = vld [vmem:[%s221 + $0xc8] sm:$0xff]
                %250 = vst [vmem:[%s222 + $0x68] sm:$0xff] %v249
                %v251 = vld [vmem:[%s221 + $0xd0] sm:$0xff]
                %252 = vst [vmem:[%s222 + $0x70] sm:$0xff] %v251
                %v253 = vld [vmem:[%s221 + $0xd8] sm:$0xff]
                %254 = vst [vmem:[%s222 + $0x78] sm:$0xff] %v253
                %v255 = vld [vmem:[%s221 + $0x100] sm:$0xff]
                %256 = vst [vmem:[%s222 + $0x80] sm:$0xff] %v255
                %v257 = vld [vmem:[%s221 + $0x108] sm:$0xff]
                %258 = vst [vmem:[%s222 + $0x88] sm:$0xff] %v257
                %v259 = vld [vmem:[%s221 + $0x110] sm:$0xff]
                %260 = vst [vmem:[%s222 + $0x90] sm:$0xff] %v259
                %v261 = vld [vmem:[%s221 + $0x118] sm:$0xff]
                %262 = vst [vmem:[%s222 + $0x98] sm:$0xff] %v261
                %v263 = vld [vmem:[%s221 + $0x140] sm:$0xff]
                %264 = vst [vmem:[%s222 + $0xa0] sm:$0xff] %v263
                %v265 = vld [vmem:[%s221 + $0x148] sm:$0xff]
                %266 = vst [vmem:[%s222 + $0xa8] sm:$0xff] %v265
                %v267 = vld [vmem:[%s221 + $0x150] sm:$0xff]
                %268 = vst [vmem:[%s222 + $0xb0] sm:$0xff] %v267
                %v269 = vld [vmem:[%s221 + $0x158] sm:$0xff]
                %270 = vst [vmem:[%s222 + $0xb8] sm:$0xff] %v269
                %v271 = vld [vmem:[%s221 + $0x180] sm:$0xff]
                %272 = vst [vmem:[%s222 + $0xc0] sm:$0xff] %v271
                %v273 = vld [vmem:[%s221 + $0x188] sm:$0xff]
                %274 = vst [vmem:[%s222 + $0xc8] sm:$0xff] %v273
                %v275 = vld [vmem:[%s221 + $0x190] sm:$0xff]
                %276 = vst [vmem:[%s222 + $0xd0] sm:$0xff] %v275
                %v277 = vld [vmem:[%s221 + $0x198] sm:$0xff]
                %278 = vst [vmem:[%s222 + $0xd8] sm:$0xff] %v277
                %v279 = vld [vmem:[%s221 + $0x1c0] sm:$0xff]
                %280 = vst [vmem:[%s222 + $0xe0] sm:$0xff] %v279
                %v281 = vld [vmem:[%s221 + $0x1c8] sm:$0xff]
                %282 = vst [vmem:[%s222 + $0xe8] sm:$0xff] %v281
                %v283 = vld [vmem:[%s221 + $0x1d0] sm:$0xff]
                %284 = vst [vmem:[%s222 + $0xf0] sm:$0xff] %v283
                %v285 = vld [vmem:[%s221 + $0x1d8] sm:$0xff]
                %286 = vst [vmem:[%s222 + $0xf8] sm:$0xff] %v285
                %v287 = vld [vmem:[%s221 + $0x200] sm:$0xff]
                %288 = vst [vmem:[%s222 + $0x100] sm:$0xff] %v287
                %v289 = vld [vmem:[%s221 + $0x208] sm:$0xff]
                %290 = vst [vmem:[%s222 + $0x108] sm:$0xff] %v289
                %v291 = vld [vmem:[%s221 + $0x210] sm:$0xff]
                %292 = vst [vmem:[%s222 + $0x110] sm:$0xff] %v291
                %v293 = vld [vmem:[%s221 + $0x218] sm:$0xff]
                %294 = vst [vmem:[%s222 + $0x118] sm:$0xff] %v293
                %v295 = vld [vmem:[%s221 + $0x240] sm:$0xff]
                %296 = vst [vmem:[%s222 + $0x120] sm:$0xff] %v295
                %v297 = vld [vmem:[%s221 + $0x248] sm:$0xff]
                %298 = vst [vmem:[%s222 + $0x128] sm:$0xff] %v297
                %v299 = vld [vmem:[%s221 + $0x250] sm:$0xff]
                %300 = vst [vmem:[%s222 + $0x130] sm:$0xff] %v299
                %v301 = vld [vmem:[%s221 + $0x258] sm:$0xff]
                %302 = vst [vmem:[%s222 + $0x138] sm:$0xff] %v301
                %v303 = vld [vmem:[%s221 + $0x280] sm:$0xff]
                %304 = vst [vmem:[%s222 + $0x140] sm:$0xff] %v303
                %v305 = vld [vmem:[%s221 + $0x288] sm:$0xff]
                %306 = vst [vmem:[%s222 + $0x148] sm:$0xff] %v305
                %v307 = vld [vmem:[%s221 + $0x290] sm:$0xff]
                %308 = vst [vmem:[%s222 + $0x150] sm:$0xff] %v307
                %v309 = vld [vmem:[%s221 + $0x298] sm:$0xff]
                %310 = vst [vmem:[%s222 + $0x158] sm:$0xff] %v309
                %v311 = vld [vmem:[%s221 + $0x2c0] sm:$0xff]
                %312 = vst [vmem:[%s222 + $0x160] sm:$0xff] %v311
                %v313 = vld [vmem:[%s221 + $0x2c8] sm:$0xff]
                %314 = vst [vmem:[%s222 + $0x168] sm:$0xff] %v313
                %v315 = vld [vmem:[%s221 + $0x2d0] sm:$0xff]
                %316 = vst [vmem:[%s222 + $0x170] sm:$0xff] %v315
                %v317 = vld [vmem:[%s221 + $0x2d8] sm:$0xff]
                %318 = vst [vmem:[%s222 + $0x178] sm:$0xff] %v317
                %v319 = vld [vmem:[%s221 + $0x300] sm:$0xff]
                %320 = vst [vmem:[%s222 + $0x180] sm:$0xff] %v319
                %v321 = vld [vmem:[%s221 + $0x308] sm:$0xff]
                %322 = vst [vmem:[%s222 + $0x188] sm:$0xff] %v321
                %v323 = vld [vmem:[%s221 + $0x310] sm:$0xff]
                %324 = vst [vmem:[%s222 + $0x190] sm:$0xff] %v323
                %v325 = vld [vmem:[%s221 + $0x318] sm:$0xff]
                %326 = vst [vmem:[%s222 + $0x198] sm:$0xff] %v325
                %v327 = vld [vmem:[%s221 + $0x340] sm:$0xff]
                %328 = vst [vmem:[%s222 + $0x1a0] sm:$0xff] %v327
                %v329 = vld [vmem:[%s221 + $0x348] sm:$0xff]
                %330 = vst [vmem:[%s222 + $0x1a8] sm:$0xff] %v329
                %v331 = vld [vmem:[%s221 + $0x350] sm:$0xff]
                %332 = vst [vmem:[%s222 + $0x1b0] sm:$0xff] %v331
                %v333 = vld [vmem:[%s221 + $0x358] sm:$0xff]
                %334 = vst [vmem:[%s222 + $0x1b8] sm:$0xff] %v333
                %v335 = vld [vmem:[%s221 + $0x380] sm:$0xff]
                %336 = vst [vmem:[%s222 + $0x1c0] sm:$0xff] %v335
                %v337 = vld [vmem:[%s221 + $0x388] sm:$0xff]
                %338 = vst [vmem:[%s222 + $0x1c8] sm:$0xff] %v337
                %v339 = vld [vmem:[%s221 + $0x390] sm:$0xff]
                %340 = vst [vmem:[%s222 + $0x1d0] sm:$0xff] %v339
                %v341 = vld [vmem:[%s221 + $0x398] sm:$0xff]
                %342 = vst [vmem:[%s222 + $0x1d8] sm:$0xff] %v341
                %v343 = vld [vmem:[%s221 + $0x3c0] sm:$0xff]
                %344 = vst [vmem:[%s222 + $0x1e0] sm:$0xff] %v343
                %v345 = vld [vmem:[%s221 + $0x3c8] sm:$0xff]
                %346 = vst [vmem:[%s222 + $0x1e8] sm:$0xff] %v345
                %v347 = vld [vmem:[%s221 + $0x3d0] sm:$0xff]
                %348 = vst [vmem:[%s222 + $0x1f0] sm:$0xff] %v347
                %v349 = vld [vmem:[%s221 + $0x3d8] sm:$0xff]
                %350 = vst [vmem:[%s222 + $0x1f8] sm:$0xff] %v349
              $region37: #{basic_conv3d_forward.2} parent=31 // loop_footer
                %s220 = sadd.s32 1, %s216
              $region38: #{basic_conv3d_forward.2} parent=31 // loop_footer_branch
                %215 = sbr.rel target = $region34
              $region39: #{basic_conv3d_forward.2} parent=31 // loop_exit
                _
            $region32: #{basic_conv3d_forward.2} parent=27 // pred_fallthru
              _
            // Predicated region
            $region40: #{basic_conv3d_forward.2} parent=27 // pred_check
              _
            $region41: #{basic_conv3d_forward.2} parent=27 // pred_check_branch
              %352 = sbr.rel target = $region43
            $region42: #{basic_conv3d_forward.2} parent=27 // pred_region
              _
            $region43: #{basic_conv3d_forward.2} parent=27 // pred_fallthru
              _
          $region28: #{basic_conv3d_forward.2} parent=23 // pred_fallthru
            _
          %353 = vnop
        $region24: #{basic_conv3d_forward.2} parent=19 // pred_fallthru
          _
      $region20: #{basic_conv3d_forward.2} parent=5 // pred_fallthru
        _
      %p354 = scmp.le.s32.totalorder 1, %s11
      %p355 = scmp.lt.s32.totalorder %s11, 5
      %p356 = pnand %p354, %p355
      %p357 = pneg %p356
      // Predicated region
      $region44: #{basic_conv3d_forward.2} parent=5 // pred_check
        _
      $region45: #{basic_conv3d_forward.2} parent=5 // pred_check_branch
        %359 = sbr.rel (%p356) target = $region47
      $region46: #{basic_conv3d_forward.2} parent=5 // pred_region
        %s360 = ssub.s32 %s11, 1
        %s361 = sand.u32 %s47, 1
        %s362 = sand.u32 %s47, 1
        %s363 = smul.addr %s362, 512
        %s364 = scalar_lea.vmem [#allocation3], %s363
        // Predicated region
        $region48: #{basic_conv3d_forward.2} parent=46 // pred_check
          %p365 = pneg %p60
        $region49: #{basic_conv3d_forward.2} parent=46 // pred_check_branch
          %367 = sbr.rel (%p365) target = $region51
        $region50: #{basic_conv3d_forward.2} parent=46 // pred_region
          _
        $region51: #{basic_conv3d_forward.2} parent=46 // pred_fallthru
          _
        %s368 = sand.u32 %s47, 1
        %s369 = sand.u32 %s47, 1
        %s370 = smul.addr %s369, 512
        %s371 = scalar_lea.vmem [#allocation3], %s370
        %p372 = pneg %p60
        %p373 = pneg %p57
        %p374 = scmp.lt.s32.totalorder %s23, 0
        %s375 = scalar_select %p374, %s23, 0
        %s376 = smul.addr %s375, 4
        %s377 = scalar_lea.vmem %s1, %s376
        %p378 = pneg %p86
        %p379 = pneg %p83
        %p380 = pneg %p114
        %p381 = pneg %p111
        %s382 = sand.u32 %s101, 1
        %s383 = sand.u32 %s101, 1
        %s384 = smul.addr %s383, 64
        %s385 = scalar_lea.vmem [#allocation4], %s384
        %p386 = pneg %p142
        %p387 = pneg %p139
        %p388 = scmp.lt.s32.totalorder %s21, 1
        %s389 = scalar_select %p388, %s21, 1
        %p390 = scmp.lt.s32.totalorder %s22, 1
        %s391 = scalar_select %p390, %s22, 1
        %s392 = smul.addr %s391, 2
        %s393 = smul.addr %s389, 4
        %s394 = sadd.s32 %s392, %s393
        %s395 = smul.addr %s394, 8
        %s396 = scalar_lea.vmem %s3, %s395
        %p397 = pneg %p170
        %p398 = pneg %p167
        %p399 = scmp.lt.s32.totalorder %s21, 1
        %s400 = scalar_select %p399, %s21, 1
        %p401 = scmp.lt.s32.totalorder %s22, 1
        %s402 = scalar_select %p401, %s22, 1
        %s403 = smul.addr %s402, 2
        %s404 = smul.addr %s400, 4
        %s405 = sadd.s32 %s403, %s404
        %s406 = smul.addr %s405, 8
        %s407 = scalar_lea.vmem %s4, %s406
        %s408 = smul.u32 16, %s23
        %s409 = smul.u32 8, %s22
        %p410 = scmp.lt.s32.totalorder %s23, 0
        %s411 = scalar_select %p410, %s23, 0
        %s412 = smul.addr %s411, 4
        %s413 = scalar_lea.vmem %s1, %s412
        %s414 = smul.u32 8, %s22
        %p415 = scmp.lt.s32.totalorder %s21, 1
        %s416 = scalar_select %p415, %s21, 1
        %p417 = scmp.lt.s32.totalorder %s22, 1
        %s418 = scalar_select %p417, %s22, 1
        %s419 = smul.addr %s418, 2
        %s420 = smul.addr %s416, 4
        %s421 = sadd.s32 %s419, %s420
        %s422 = smul.addr %s421, 8
        %s423 = scalar_lea.vmem %s3, %s422
        %p424 = scmp.lt.s32.totalorder %s21, 1
        %s425 = scalar_select %p424, %s21, 1
        %p426 = scmp.lt.s32.totalorder %s22, 1
        %s427 = scalar_select %p426, %s22, 1
        %s428 = smul.addr %s427, 2
        %s429 = smul.addr %s425, 4
        %s430 = sadd.s32 %s428, %s429
        %s431 = smul.addr %s430, 8
        %s432 = scalar_lea.vmem %s4, %s431
        %p434 = scmp.eq.s32.totalorder %s23, 0
        // Predicated region
        $region52: #{basic_conv3d_forward.2} parent=46 // pred_check
          %p435 = pneg %p434
        $region53: #{basic_conv3d_forward.2} parent=46 // pred_check_branch
          %437 = sbr.rel (%p435) target = $region55
        $region54: #{basic_conv3d_forward.2} parent=46 // pred_region
          %438 = vst [vmem:[#allocation2] sm:$0xff] 0.0
          %439 = vst [vmem:[#allocation2 + $0x8] sm:$0xff] 0.0
          %440 = vst [vmem:[#allocation2 + $0x10] sm:$0xff] 0.0
          %441 = vst [vmem:[#allocation2 + $0x18] sm:$0xff] 0.0
          %442 = vst [vmem:[#allocation2 + $0x20] sm:$0xff] 0.0
          %443 = vst [vmem:[#allocation2 + $0x28] sm:$0xff] 0.0
          %444 = vst [vmem:[#allocation2 + $0x30] sm:$0xff] 0.0
          %445 = vst [vmem:[#allocation2 + $0x38] sm:$0xff] 0.0
          %446 = vst [vmem:[#allocation2 + $0x40] sm:$0xff] 0.0
          %447 = vst [vmem:[#allocation2 + $0x48] sm:$0xff] 0.0
          %448 = vst [vmem:[#allocation2 + $0x50] sm:$0xff] 0.0
          %449 = vst [vmem:[#allocation2 + $0x58] sm:$0xff] 0.0
          %450 = vst [vmem:[#allocation2 + $0x60] sm:$0xff] 0.0
          %451 = vst [vmem:[#allocation2 + $0x68] sm:$0xff] 0.0
          %452 = vst [vmem:[#allocation2 + $0x70] sm:$0xff] 0.0
          %453 = vst [vmem:[#allocation2 + $0x78] sm:$0xff] 0.0
        $region55: #{basic_conv3d_forward.2} parent=46 // pred_fallthru
          _
        %v454 = vld [vmem:[#allocation2] sm:$0xff]
        %v455 = vld [vmem:[#allocation2 + $0x8] sm:$0xff]
        %v456 = vld [vmem:[#allocation2 + $0x10] sm:$0xff]
        %v457 = vld [vmem:[#allocation2 + $0x18] sm:$0xff]
        %v458 = vld [vmem:[#allocation2 + $0x20] sm:$0xff]
        %v459 = vld [vmem:[#allocation2 + $0x28] sm:$0xff]
        %v460 = vld [vmem:[#allocation2 + $0x30] sm:$0xff]
        %v461 = vld [vmem:[#allocation2 + $0x38] sm:$0xff]
        %v462 = vld [vmem:[#allocation2 + $0x40] sm:$0xff]
        %v463 = vld [vmem:[#allocation2 + $0x48] sm:$0xff]
        %v464 = vld [vmem:[#allocation2 + $0x50] sm:$0xff]
        %v465 = vld [vmem:[#allocation2 + $0x58] sm:$0xff]
        %v466 = vld [vmem:[#allocation2 + $0x60] sm:$0xff]
        %v467 = vld [vmem:[#allocation2 + $0x68] sm:$0xff]
        %v468 = vld [vmem:[#allocation2 + $0x70] sm:$0xff]
        %v469 = vld [vmem:[#allocation2 + $0x78] sm:$0xff]
        %v470 = vld [vmem:[%s413] sm:$0xf]
        %v471 = vld [vmem:[%s413 + $0x4] sm:$0xf]
        %v472 = vld [vmem:[%s364] sm:$0xff]
        %v473 = vld [vmem:[%s364 + $0x8] sm:$0xff]
        %v474 = vld [vmem:[%s364 + $0x10] sm:$0xff]
        %v475 = vld [vmem:[%s364 + $0x18] sm:$0xff]
        %v476 = vld [vmem:[%s364 + $0x20] sm:$0xff]
        %v477 = vld [vmem:[%s364 + $0x28] sm:$0xff]
        %v478 = vld [vmem:[%s364 + $0x30] sm:$0xff]
        %v479 = vld [vmem:[%s364 + $0x38] sm:$0xff]
        %v480 = vld [vmem:[%s364 + $0x40] sm:$0xff]
        %v481 = vld [vmem:[%s364 + $0x48] sm:$0xff]
        %v482 = vld [vmem:[%s364 + $0x50] sm:$0xff]
        %v483 = vld [vmem:[%s364 + $0x58] sm:$0xff]
        %v484 = vld [vmem:[%s364 + $0x60] sm:$0xff]
        %v485 = vld [vmem:[%s364 + $0x68] sm:$0xff]
        %v486 = vld [vmem:[%s364 + $0x70] sm:$0xff]
        %v487 = vld [vmem:[%s364 + $0x78] sm:$0xff]
        %v488 = vld [vmem:[%s364 + $0x80] sm:$0xff]
        %v489 = vld [vmem:[%s364 + $0x88] sm:$0xff]
        %v490 = vld [vmem:[%s364 + $0x90] sm:$0xff]
        %v491 = vld [vmem:[%s364 + $0x98] sm:$0xff]
        %v492 = vld [vmem:[%s364 + $0xa0] sm:$0xff]
        %v493 = vld [vmem:[%s364 + $0xa8] sm:$0xff]
        %v494 = vld [vmem:[%s364 + $0xb0] sm:$0xff]
        %v495 = vld [vmem:[%s364 + $0xb8] sm:$0xff]
        %v496 = vld [vmem:[%s364 + $0xc0] sm:$0xff]
        %v497 = vld [vmem:[%s364 + $0xc8] sm:$0xff]
        %v498 = vld [vmem:[%s364 + $0xd0] sm:$0xff]
        %v499 = vld [vmem:[%s364 + $0xd8] sm:$0xff]
        %v500 = vld [vmem:[%s364 + $0xe0] sm:$0xff]
        %v501 = vld [vmem:[%s364 + $0xe8] sm:$0xff]
        %v502 = vld [vmem:[%s364 + $0xf0] sm:$0xff]
        %v503 = vld [vmem:[%s364 + $0xf8] sm:$0xff]
        %v504 = vld [vmem:[%s364 + $0x100] sm:$0xff]
        %v505 = vld [vmem:[%s364 + $0x108] sm:$0xff]
        %v506 = vld [vmem:[%s364 + $0x110] sm:$0xff]
        %v507 = vld [vmem:[%s364 + $0x118] sm:$0xff]
        %v508 = vld [vmem:[%s364 + $0x120] sm:$0xff]
        %v509 = vld [vmem:[%s364 + $0x128] sm:$0xff]
        %v510 = vld [vmem:[%s364 + $0x130] sm:$0xff]
        %v511 = vld [vmem:[%s364 + $0x138] sm:$0xff]
        %v512 = vld [vmem:[%s364 + $0x140] sm:$0xff]
        %v513 = vld [vmem:[%s364 + $0x148] sm:$0xff]
        %v514 = vld [vmem:[%s364 + $0x150] sm:$0xff]
        %v515 = vld [vmem:[%s364 + $0x158] sm:$0xff]
        %v516 = vld [vmem:[%s364 + $0x160] sm:$0xff]
        %v517 = vld [vmem:[%s364 + $0x168] sm:$0xff]
        %v518 = vld [vmem:[%s364 + $0x170] sm:$0xff]
        %v519 = vld [vmem:[%s364 + $0x178] sm:$0xff]
        %v520 = vld [vmem:[%s364 + $0x180] sm:$0xff]
        %v521 = vld [vmem:[%s364 + $0x188] sm:$0xff]
        %v522 = vld [vmem:[%s364 + $0x190] sm:$0xff]
        %v523 = vld [vmem:[%s364 + $0x198] sm:$0xff]
        %v524 = vld [vmem:[%s364 + $0x1a0] sm:$0xff]
        %v525 = vld [vmem:[%s364 + $0x1a8] sm:$0xff]
        %v526 = vld [vmem:[%s364 + $0x1b0] sm:$0xff]
        %v527 = vld [vmem:[%s364 + $0x1b8] sm:$0xff]
        %v528 = vld [vmem:[%s364 + $0x1c0] sm:$0xff]
        %v529 = vld [vmem:[%s364 + $0x1c8] sm:$0xff]
        %v530 = vld [vmem:[%s364 + $0x1d0] sm:$0xff]
        %v531 = vld [vmem:[%s364 + $0x1d8] sm:$0xff]
        %v532 = vld [vmem:[%s364 + $0x1e0] sm:$0xff]
        %v533 = vld [vmem:[%s364 + $0x1e8] sm:$0xff]
        %v534 = vld [vmem:[%s364 + $0x1f0] sm:$0xff]
        %v535 = vld [vmem:[%s364 + $0x1f8] sm:$0xff]
        %v538 = vunpack.c.l.b16 %v470
        %v539 = vunpack.c.l.b16 %v471
        %v540 = vpack.c.b16 %v539, %v538
        %v606 = vunpack.c.l.b16 %v472
        %v607 = vunpack.c.h.b16 %v472
        %v608 = vunpack.c.l.b16 %v473
        %v609 = vunpack.c.h.b16 %v473
        %v610 = vunpack.c.l.b16 %v474
        %v611 = vunpack.c.h.b16 %v474
        %v612 = vunpack.c.l.b16 %v475
        %v613 = vunpack.c.h.b16 %v475
        %v614 = vunpack.c.l.b16 %v476
        %v615 = vunpack.c.h.b16 %v476
        %v616 = vunpack.c.l.b16 %v477
        %v617 = vunpack.c.h.b16 %v477
        %v618 = vunpack.c.l.b16 %v478
        %v619 = vunpack.c.h.b16 %v478
        %v620 = vunpack.c.l.b16 %v479
        %v621 = vunpack.c.h.b16 %v479
        %v622 = vunpack.c.l.b16 %v480
        %v623 = vunpack.c.h.b16 %v480
        %v624 = vunpack.c.l.b16 %v481
        %v625 = vunpack.c.h.b16 %v481
        %v626 = vunpack.c.l.b16 %v482
        %v627 = vunpack.c.h.b16 %v482
        %v628 = vunpack.c.l.b16 %v483
        %v629 = vunpack.c.h.b16 %v483
        %v630 = vunpack.c.l.b16 %v484
        %v631 = vunpack.c.h.b16 %v484
        %v632 = vunpack.c.l.b16 %v485
        %v633 = vunpack.c.h.b16 %v485
        %v634 = vunpack.c.l.b16 %v486
        %v635 = vunpack.c.h.b16 %v486
        %v636 = vunpack.c.l.b16 %v487
        %v637 = vunpack.c.h.b16 %v487
        %v638 = vunpack.c.l.b16 %v488
        %v639 = vunpack.c.h.b16 %v488
        %v640 = vunpack.c.l.b16 %v489
        %v641 = vunpack.c.h.b16 %v489
        %v642 = vunpack.c.l.b16 %v490
        %v643 = vunpack.c.h.b16 %v490
        %v644 = vunpack.c.l.b16 %v491
        %v645 = vunpack.c.h.b16 %v491
        %v646 = vunpack.c.l.b16 %v492
        %v647 = vunpack.c.h.b16 %v492
        %v648 = vunpack.c.l.b16 %v493
        %v649 = vunpack.c.h.b16 %v493
        %v650 = vunpack.c.l.b16 %v494
        %v651 = vunpack.c.h.b16 %v494
        %v652 = vunpack.c.l.b16 %v495
        %v653 = vunpack.c.h.b16 %v495
        %v654 = vunpack.c.l.b16 %v496
        %v655 = vunpack.c.h.b16 %v496
        %v656 = vunpack.c.l.b16 %v497
        %v657 = vunpack.c.h.b16 %v497
        %v658 = vunpack.c.l.b16 %v498
        %v659 = vunpack.c.h.b16 %v498
        %v660 = vunpack.c.l.b16 %v499
        %v661 = vunpack.c.h.b16 %v499
        %v662 = vunpack.c.l.b16 %v500
        %v663 = vunpack.c.h.b16 %v500
        %v664 = vunpack.c.l.b16 %v501
        %v665 = vunpack.c.h.b16 %v501
        %v666 = vunpack.c.l.b16 %v502
        %v667 = vunpack.c.h.b16 %v502
        %v668 = vunpack.c.l.b16 %v503
        %v669 = vunpack.c.h.b16 %v503
        %v670 = vunpack.c.l.b16 %v504
        %v671 = vunpack.c.h.b16 %v504
        %v672 = vunpack.c.l.b16 %v505
        %v673 = vunpack.c.h.b16 %v505
        %v674 = vunpack.c.l.b16 %v506
        %v675 = vunpack.c.h.b16 %v506
        %v676 = vunpack.c.l.b16 %v507
        %v677 = vunpack.c.h.b16 %v507
        %v678 = vunpack.c.l.b16 %v508
        %v679 = vunpack.c.h.b16 %v508
        %v680 = vunpack.c.l.b16 %v509
        %v681 = vunpack.c.h.b16 %v509
        %v682 = vunpack.c.l.b16 %v510
        %v683 = vunpack.c.h.b16 %v510
        %v684 = vunpack.c.l.b16 %v511
        %v685 = vunpack.c.h.b16 %v511
        %v686 = vunpack.c.l.b16 %v512
        %v687 = vunpack.c.h.b16 %v512
        %v688 = vunpack.c.l.b16 %v513
        %v689 = vunpack.c.h.b16 %v513
        %v690 = vunpack.c.l.b16 %v514
        %v691 = vunpack.c.h.b16 %v514
        %v692 = vunpack.c.l.b16 %v515
        %v693 = vunpack.c.h.b16 %v515
        %v694 = vunpack.c.l.b16 %v516
        %v695 = vunpack.c.h.b16 %v516
        %v696 = vunpack.c.l.b16 %v517
        %v697 = vunpack.c.h.b16 %v517
        %v698 = vunpack.c.l.b16 %v518
        %v699 = vunpack.c.h.b16 %v518
        %v700 = vunpack.c.l.b16 %v519
        %v701 = vunpack.c.h.b16 %v519
        %v702 = vunpack.c.l.b16 %v520
        %v703 = vunpack.c.h.b16 %v520
        %v704 = vunpack.c.l.b16 %v521
        %v705 = vunpack.c.h.b16 %v521
        %v706 = vunpack.c.l.b16 %v522
        %v707 = vunpack.c.h.b16 %v522
        %v708 = vunpack.c.l.b16 %v523
        %v709 = vunpack.c.h.b16 %v523
        %v710 = vunpack.c.l.b16 %v524
        %v711 = vunpack.c.h.b16 %v524
        %v712 = vunpack.c.l.b16 %v525
        %v713 = vunpack.c.h.b16 %v525
        %v714 = vunpack.c.l.b16 %v526
        %v715 = vunpack.c.h.b16 %v526
        %v716 = vunpack.c.l.b16 %v527
        %v717 = vunpack.c.h.b16 %v527
        %v718 = vunpack.c.l.b16 %v528
        %v719 = vunpack.c.h.b16 %v528
        %v720 = vunpack.c.l.b16 %v529
        %v721 = vunpack.c.h.b16 %v529
        %v722 = vunpack.c.l.b16 %v530
        %v723 = vunpack.c.h.b16 %v530
        %v724 = vunpack.c.l.b16 %v531
        %v725 = vunpack.c.h.b16 %v531
        %v726 = vunpack.c.l.b16 %v532
        %v727 = vunpack.c.h.b16 %v532
        %v728 = vunpack.c.l.b16 %v533
        %v729 = vunpack.c.h.b16 %v533
        %v730 = vunpack.c.l.b16 %v534
        %v731 = vunpack.c.h.b16 %v534
        %v732 = vunpack.c.l.b16 %v535
        %v733 = vunpack.c.h.b16 %v535
        %v734 = vpack.c.b16 %v614, %v606
        %v735 = vpack.c.b16 %v615, %v607
        %v736 = vpack.c.b16 %v616, %v608
        %v737 = vpack.c.b16 %v617, %v609
        %v738 = vpack.c.b16 %v618, %v610
        %v739 = vpack.c.b16 %v619, %v611
        %v740 = vpack.c.b16 %v620, %v612
        %v741 = vpack.c.b16 %v621, %v613
        %v742 = vpack.c.b16 %v630, %v622
        %v743 = vpack.c.b16 %v631, %v623
        %v744 = vpack.c.b16 %v632, %v624
        %v745 = vpack.c.b16 %v633, %v625
        %v746 = vpack.c.b16 %v634, %v626
        %v747 = vpack.c.b16 %v635, %v627
        %v748 = vpack.c.b16 %v636, %v628
        %v749 = vpack.c.b16 %v637, %v629
        %v750 = vpack.c.b16 %v646, %v638
        %v751 = vpack.c.b16 %v647, %v639
        %v752 = vpack.c.b16 %v648, %v640
        %v753 = vpack.c.b16 %v649, %v641
        %v754 = vpack.c.b16 %v650, %v642
        %v755 = vpack.c.b16 %v651, %v643
        %v756 = vpack.c.b16 %v652, %v644
        %v757 = vpack.c.b16 %v653, %v645
        %v758 = vpack.c.b16 %v662, %v654
        %v759 = vpack.c.b16 %v663, %v655
        %v760 = vpack.c.b16 %v664, %v656
        %v761 = vpack.c.b16 %v665, %v657
        %v762 = vpack.c.b16 %v666, %v658
        %v763 = vpack.c.b16 %v667, %v659
        %v764 = vpack.c.b16 %v668, %v660
        %v765 = vpack.c.b16 %v669, %v661
        %v766 = vpack.c.b16 %v678, %v670
        %v767 = vpack.c.b16 %v679, %v671
        %v768 = vpack.c.b16 %v680, %v672
        %v769 = vpack.c.b16 %v681, %v673
        %v770 = vpack.c.b16 %v682, %v674
        %v771 = vpack.c.b16 %v683, %v675
        %v772 = vpack.c.b16 %v684, %v676
        %v773 = vpack.c.b16 %v685, %v677
        %v774 = vpack.c.b16 %v694, %v686
        %v775 = vpack.c.b16 %v695, %v687
        %v776 = vpack.c.b16 %v696, %v688
        %v777 = vpack.c.b16 %v697, %v689
        %v778 = vpack.c.b16 %v698, %v690
        %v779 = vpack.c.b16 %v699, %v691
        %v780 = vpack.c.b16 %v700, %v692
        %v781 = vpack.c.b16 %v701, %v693
        %v782 = vpack.c.b16 %v710, %v702
        %v783 = vpack.c.b16 %v711, %v703
        %v784 = vpack.c.b16 %v712, %v704
        %v785 = vpack.c.b16 %v713, %v705
        %v786 = vpack.c.b16 %v714, %v706
        %v787 = vpack.c.b16 %v715, %v707
        %v788 = vpack.c.b16 %v716, %v708
        %v789 = vpack.c.b16 %v717, %v709
        %v790 = vpack.c.b16 %v726, %v718
        %v791 = vpack.c.b16 %v727, %v719
        %v792 = vpack.c.b16 %v728, %v720
        %v793 = vpack.c.b16 %v729, %v721
        %v794 = vpack.c.b16 %v730, %v722
        %v795 = vpack.c.b16 %v731, %v723
        %v796 = vpack.c.b16 %v732, %v724
        %v797 = vpack.c.b16 %v733, %v725
        %862 = vmatprep.subr.bf16.mxu0 %v735
        %863 = vmatpush1.bf16.msra.mxu0 %v734
        %864 = vmatprep.subr.bf16.mxu0 %v743
        %865 = vmatpush1.bf16.msra.mxu0 %v742
        %866 = vmatprep.subr.bf16.mxu0 %v751
        %867 = vmatpush1.bf16.msra.mxu0 %v750
        %868 = vmatprep.subr.bf16.mxu0 %v759
        %869 = vmatpush1.bf16.msra.mxu0 %v758
        %870 = vmatprep.subr.bf16.mxu0 %v767
        %871 = vmatpush1.bf16.msra.mxu0 %v766
        %872 = vmatprep.subr.bf16.mxu0 %v775
        %873 = vmatpush1.bf16.msra.mxu0 %v774
        %874 = vmatprep.subr.bf16.mxu0 %v783
        %875 = vmatpush1.bf16.msra.mxu0 %v782
        %876 = vmatprep.subr.bf16.mxu0 %v791
        %877 = vmatpush1.bf16.msra.mxu0 %v790
        %878 = vmatprep.subr.bf16.mxu0 0
        %879 = vmatpush1.bf16.msra.mxu0 0
        %880 = vmatprep.subr.bf16.mxu0 0
        %881 = vmatpush1.bf16.msra.mxu0 0
        %882 = vmatprep.subr.bf16.mxu0 0
        %883 = vmatpush1.bf16.msra.mxu0 0
        %884 = vmatprep.subr.bf16.mxu0 0
        %885 = vmatpush1.bf16.msra.mxu0 0
        %886 = vmatprep.subr.bf16.mxu0 0
        %887 = vmatpush1.bf16.msra.mxu0 0
        %888 = vmatprep.subr.bf16.mxu0 0
        %889 = vmatpush1.bf16.msra.mxu0 0
        %890 = vmatprep.subr.bf16.mxu0 0
        %891 = vmatpush1.bf16.msra.mxu0 0
        %892 = vmatprep.subr.bf16.mxu0 0
        %893 = vmatpush1.bf16.msra.mxu0 0
        %894 = vmatprep.mubr.bf16.mxu0 0
        %895 = vmatmul.mubr.bf16.gmra.mrb[0].mxu0 %v540
        %v896 = vpop.f32.mrb[0].mxu0
        %v897 = vadd.f32 0.0, %v896
        %v898 = vpop.f32.mrb[0].mxu0
        %v899 = vadd.f32 0.0, %v898
        %v900 = vpop.f32.mrb[0].mxu0
        %v901 = vadd.f32 0.0, %v900
        %v902 = vpop.f32.mrb[0].mxu0
        %v903 = vadd.f32 0.0, %v902
        %904 = vdwg.mxu0
        %905 = vmatprep.subr.bf16.mxu0 %v737
        %906 = vmatpush1.bf16.msra.mxu0 %v736
        %907 = vmatprep.subr.bf16.mxu0 %v745
        %908 = vmatpush1.bf16.msra.mxu0 %v744
        %909 = vmatprep.subr.bf16.mxu0 %v753
        %910 = vmatpush1.bf16.msra.mxu0 %v752
        %911 = vmatprep.subr.bf16.mxu0 %v761
        %912 = vmatpush1.bf16.msra.mxu0 %v760
        %913 = vmatprep.subr.bf16.mxu0 %v769
        %914 = vmatpush1.bf16.msra.mxu0 %v768
        %915 = vmatprep.subr.bf16.mxu0 %v777
        %916 = vmatpush1.bf16.msra.mxu0 %v776
        %917 = vmatprep.subr.bf16.mxu0 %v785
        %918 = vmatpush1.bf16.msra.mxu0 %v784
        %919 = vmatprep.subr.bf16.mxu0 %v793
        %920 = vmatpush1.bf16.msra.mxu0 %v792
        %921 = vmatprep.subr.bf16.mxu0 0
        %922 = vmatpush1.bf16.msra.mxu0 0
        %923 = vmatprep.subr.bf16.mxu0 0
        %924 = vmatpush1.bf16.msra.mxu0 0
        %925 = vmatprep.subr.bf16.mxu0 0
        %926 = vmatpush1.bf16.msra.mxu0 0
        %927 = vmatprep.subr.bf16.mxu0 0
        %928 = vmatpush1.bf16.msra.mxu0 0
        %929 = vmatprep.subr.bf16.mxu0 0
        %930 = vmatpush1.bf16.msra.mxu0 0
        %931 = vmatprep.subr.bf16.mxu0 0
        %932 = vmatpush1.bf16.msra.mxu0 0
        %933 = vmatprep.subr.bf16.mxu0 0
        %934 = vmatpush1.bf16.msra.mxu0 0
        %935 = vmatprep.subr.bf16.mxu0 0
        %936 = vmatpush1.bf16.msra.mxu0 0
        %937 = vmatprep.mubr.bf16.mxu0 0
        %938 = vmatmul.mubr.bf16.gmra.mrb[0].mxu0 %v540
        %v939 = vpop.f32.mrb[0].mxu0
        %v940 = vadd.f32 0.0, %v939
        %v941 = vpop.f32.mrb[0].mxu0
        %v942 = vadd.f32 0.0, %v941
        %v943 = vpop.f32.mrb[0].mxu0
        %v944 = vadd.f32 0.0, %v943
        %v945 = vpop.f32.mrb[0].mxu0
        %v946 = vadd.f32 0.0, %v945
        %947 = vdwg.mxu0
        %948 = vmatprep.subr.bf16.mxu0 %v739
        %949 = vmatpush1.bf16.msra.mxu0 %v738
        %950 = vmatprep.subr.bf16.mxu0 %v747
        %951 = vmatpush1.bf16.msra.mxu0 %v746
        %952 = vmatprep.subr.bf16.mxu0 %v755
        %953 = vmatpush1.bf16.msra.mxu0 %v754
        %954 = vmatprep.subr.bf16.mxu0 %v763
        %955 = vmatpush1.bf16.msra.mxu0 %v762
        %956 = vmatprep.subr.bf16.mxu0 %v771
        %957 = vmatpush1.bf16.msra.mxu0 %v770
        %958 = vmatprep.subr.bf16.mxu0 %v779
        %959 = vmatpush1.bf16.msra.mxu0 %v778
        %960 = vmatprep.subr.bf16.mxu0 %v787
        %961 = vmatpush1.bf16.msra.mxu0 %v786
        %962 = vmatprep.subr.bf16.mxu0 %v795
        %963 = vmatpush1.bf16.msra.mxu0 %v794
        %964 = vmatprep.subr.bf16.mxu0 0
        %965 = vmatpush1.bf16.msra.mxu0 0
        %966 = vmatprep.subr.bf16.mxu0 0
        %967 = vmatpush1.bf16.msra.mxu0 0
        %968 = vmatprep.subr.bf16.mxu0 0
        %969 = vmatpush1.bf16.msra.mxu0 0
        %970 = vmatprep.subr.bf16.mxu0 0
        %971 = vmatpush1.bf16.msra.mxu0 0
        %972 = vmatprep.subr.bf16.mxu0 0
        %973 = vmatpush1.bf16.msra.mxu0 0
        %974 = vmatprep.subr.bf16.mxu0 0
        %975 = vmatpush1.bf16.msra.mxu0 0
        %976 = vmatprep.subr.bf16.mxu0 0
        %977 = vmatpush1.bf16.msra.mxu0 0
        %978 = vmatprep.subr.bf16.mxu0 0
        %979 = vmatpush1.bf16.msra.mxu0 0
        %980 = vmatprep.mubr.bf16.mxu0 0
        %981 = vmatmul.mubr.bf16.gmra.mrb[0].mxu0 %v540
        %v982 = vpop.f32.mrb[0].mxu0
        %v983 = vadd.f32 0.0, %v982
        %v984 = vpop.f32.mrb[0].mxu0
        %v985 = vadd.f32 0.0, %v984
        %v986 = vpop.f32.mrb[0].mxu0
        %v987 = vadd.f32 0.0, %v986
        %v988 = vpop.f32.mrb[0].mxu0
        %v989 = vadd.f32 0.0, %v988
        %990 = vdwg.mxu0
        %991 = vmatprep.subr.bf16.mxu0 %v741
        %992 = vmatpush1.bf16.msra.mxu0 %v740
        %993 = vmatprep.subr.bf16.mxu0 %v749
        %994 = vmatpush1.bf16.msra.mxu0 %v748
        %995 = vmatprep.subr.bf16.mxu0 %v757
        %996 = vmatpush1.bf16.msra.mxu0 %v756
        %997 = vmatprep.subr.bf16.mxu0 %v765
        %998 = vmatpush1.bf16.msra.mxu0 %v764
        %999 = vmatprep.subr.bf16.mxu0 %v773
        %1000 = vmatpush1.bf16.msra.mxu0 %v772
        %1001 = vmatprep.subr.bf16.mxu0 %v781
        %1002 = vmatpush1.bf16.msra.mxu0 %v780
        %1003 = vmatprep.subr.bf16.mxu0 %v789
        %1004 = vmatpush1.bf16.msra.mxu0 %v788
        %1005 = vmatprep.subr.bf16.mxu0 %v797
        %1006 = vmatpush1.bf16.msra.mxu0 %v796
        %1007 = vmatprep.subr.bf16.mxu0 0
        %1008 = vmatpush1.bf16.msra.mxu0 0
        %1009 = vmatprep.subr.bf16.mxu0 0
        %1010 = vmatpush1.bf16.msra.mxu0 0
        %1011 = vmatprep.subr.bf16.mxu0 0
        %1012 = vmatpush1.bf16.msra.mxu0 0
        %1013 = vmatprep.subr.bf16.mxu0 0
        %1014 = vmatpush1.bf16.msra.mxu0 0
        %1015 = vmatprep.subr.bf16.mxu0 0
        %1016 = vmatpush1.bf16.msra.mxu0 0
        %1017 = vmatprep.subr.bf16.mxu0 0
        %1018 = vmatpush1.bf16.msra.mxu0 0
        %1019 = vmatprep.subr.bf16.mxu0 0
        %1020 = vmatpush1.bf16.msra.mxu0 0
        %1021 = vmatprep.subr.bf16.mxu0 0
        %1022 = vmatpush1.bf16.msra.mxu0 0
        %1023 = vmatprep.mubr.bf16.mxu0 0
        %1024 = vmatmul.mubr.bf16.gmra.mrb[0].mxu0 %v540
        %v1025 = vpop.f32.mrb[0].mxu0
        %v1026 = vadd.f32 0.0, %v1025
        %v1027 = vpop.f32.mrb[0].mxu0
        %v1028 = vadd.f32 0.0, %v1027
        %v1029 = vpop.f32.mrb[0].mxu0
        %v1030 = vadd.f32 0.0, %v1029
        %v1031 = vpop.f32.mrb[0].mxu0
        %v1032 = vadd.f32 0.0, %v1031
        %1033 = vdwg.mxu0
        %v1034 = vadd.f32 %v454, %v897
        %v1035 = vadd.f32 %v455, %v899
        %v1036 = vadd.f32 %v456, %v940
        %v1037 = vadd.f32 %v457, %v942
        %v1038 = vadd.f32 %v458, %v983
        %v1039 = vadd.f32 %v459, %v985
        %v1040 = vadd.f32 %v460, %v1026
        %v1041 = vadd.f32 %v461, %v1028
        %v1042 = vadd.f32 %v462, %v901
        %v1043 = vadd.f32 %v463, %v903
        %v1044 = vadd.f32 %v464, %v944
        %v1045 = vadd.f32 %v465, %v946
        %v1046 = vadd.f32 %v466, %v987
        %v1047 = vadd.f32 %v467, %v989
        %v1048 = vadd.f32 %v468, %v1030
        %v1049 = vadd.f32 %v469, %v1032
        %1050 = vst [vmem:[#allocation2] sm:$0xff] %v1034
        %1051 = vst [vmem:[#allocation2 + $0x8] sm:$0xff] %v1035
        %1052 = vst [vmem:[#allocation2 + $0x10] sm:$0xff] %v1036
        %1053 = vst [vmem:[#allocation2 + $0x18] sm:$0xff] %v1037
        %1054 = vst [vmem:[#allocation2 + $0x20] sm:$0xff] %v1038
        %1055 = vst [vmem:[#allocation2 + $0x28] sm:$0xff] %v1039
        %1056 = vst [vmem:[#allocation2 + $0x30] sm:$0xff] %v1040
        %1057 = vst [vmem:[#allocation2 + $0x38] sm:$0xff] %v1041
        %1058 = vst [vmem:[#allocation2 + $0x40] sm:$0xff] %v1042
        %1059 = vst [vmem:[#allocation2 + $0x48] sm:$0xff] %v1043
        %1060 = vst [vmem:[#allocation2 + $0x50] sm:$0xff] %v1044
        %1061 = vst [vmem:[#allocation2 + $0x58] sm:$0xff] %v1045
        %1062 = vst [vmem:[#allocation2 + $0x60] sm:$0xff] %v1046
        %1063 = vst [vmem:[#allocation2 + $0x68] sm:$0xff] %v1047
        %1064 = vst [vmem:[#allocation2 + $0x70] sm:$0xff] %v1048
        %1065 = vst [vmem:[#allocation2 + $0x78] sm:$0xff] %v1049
        // Predicated region
        $region56: #{basic_conv3d_forward.2} parent=46 // pred_check
          %p1066 = pneg %p434
        $region57: #{basic_conv3d_forward.2} parent=46 // pred_check_branch
          %1068 = sbr.rel (%p1066) target = $region59
        $region58: #{basic_conv3d_forward.2} parent=46 // pred_region
          %v1069 = vld [vmem:[#allocation2] sm:$0xff]
          %v1070 = vld [vmem:[#allocation2 + $0x8] sm:$0xff]
          %v1071 = vld [vmem:[#allocation2 + $0x10] sm:$0xff]
          %v1072 = vld [vmem:[#allocation2 + $0x18] sm:$0xff]
          %v1073 = vld [vmem:[#allocation2 + $0x20] sm:$0xff]
          %v1074 = vld [vmem:[#allocation2 + $0x28] sm:$0xff]
          %v1075 = vld [vmem:[#allocation2 + $0x30] sm:$0xff]
          %v1076 = vld [vmem:[#allocation2 + $0x38] sm:$0xff]
          %v1077 = vld [vmem:[#allocation2 + $0x40] sm:$0xff]
          %v1078 = vld [vmem:[#allocation2 + $0x48] sm:$0xff]
          %v1079 = vld [vmem:[#allocation2 + $0x50] sm:$0xff]
          %v1080 = vld [vmem:[#allocation2 + $0x58] sm:$0xff]
          %v1081 = vld [vmem:[#allocation2 + $0x60] sm:$0xff]
          %v1082 = vld [vmem:[#allocation2 + $0x68] sm:$0xff]
          %v1083 = vld [vmem:[#allocation2 + $0x70] sm:$0xff]
          %v1084 = vld [vmem:[#allocation2 + $0x78] sm:$0xff]
          %v1085 = vpack.c.bf16 %v1077, %v1069
          %v1086 = vpack.c.bf16 %v1078, %v1070
          %v1087 = vpack.c.bf16 %v1079, %v1071
          %v1088 = vpack.c.bf16 %v1080, %v1072
          %v1089 = vpack.c.bf16 %v1081, %v1073
          %v1090 = vpack.c.bf16 %v1082, %v1074
          %v1091 = vpack.c.bf16 %v1083, %v1075
          %v1092 = vpack.c.bf16 %v1084, %v1076
          %v1101 = vunpack.c.l.b16 %v1085
          %v1102 = vunpack.c.l.b16 %v1086
          %v1103 = vunpack.c.l.b16 %v1087
          %v1104 = vunpack.c.l.b16 %v1088
          %v1105 = vunpack.c.l.b16 %v1089
          %v1106 = vunpack.c.l.b16 %v1090
          %v1107 = vunpack.c.l.b16 %v1091
          %v1108 = vunpack.c.l.b16 %v1092
          %v1109 = vunpack.c.h.b16 %v1085
          %v1110 = vunpack.c.h.b16 %v1086
          %v1111 = vunpack.c.h.b16 %v1087
          %v1112 = vunpack.c.h.b16 %v1088
          %v1113 = vunpack.c.h.b16 %v1089
          %v1114 = vunpack.c.h.b16 %v1090
          %v1115 = vunpack.c.h.b16 %v1091
          %v1116 = vunpack.c.h.b16 %v1092
          %v1117 = vpack.c.b16 %v1102, %v1101
          %v1118 = vpack.c.b16 %v1104, %v1103
          %v1119 = vpack.c.b16 %v1106, %v1105
          %v1120 = vpack.c.b16 %v1108, %v1107
          %v1121 = vpack.c.b16 %v1110, %v1109
          %v1122 = vpack.c.b16 %v1112, %v1111
          %v1123 = vpack.c.b16 %v1114, %v1113
          %v1124 = vpack.c.b16 %v1116, %v1115
          %1133 = vst [vmem:[%s385] sm:$0xff] %v1117
          %1134 = vst [vmem:[%s385 + $0x8] sm:$0xff] %v1118
          %1135 = vst [vmem:[%s385 + $0x10] sm:$0xff] %v1119
          %1136 = vst [vmem:[%s385 + $0x18] sm:$0xff] %v1120
          %1137 = vst [vmem:[%s385 + $0x20] sm:$0xff] %v1121
          %1138 = vst [vmem:[%s385 + $0x28] sm:$0xff] %v1122
          %1139 = vst [vmem:[%s385 + $0x30] sm:$0xff] %v1123
          %1140 = vst [vmem:[%s385 + $0x38] sm:$0xff] %v1124
          %v1141 = vadd.f32 %v1069, %v1070
          %v1142 = vadd.f32 %v1141, %v1071
          %v1143 = vadd.f32 %v1142, %v1072
          %v1144 = vadd.f32 %v1143, %v1073
          %v1145 = vadd.f32 %v1144, %v1074
          %v1146 = vadd.f32 %v1145, %v1075
          %v1147 = vadd.f32 %v1146, %v1076
          %1148 = vadd.xlane.f32.xlu0 %v1147
          %v1149 = vpop.xlane.xlu0 %1148
          %v1150 = vadd.f32 %v1077, %v1078
          %v1151 = vadd.f32 %v1150, %v1079
          %v1152 = vadd.f32 %v1151, %v1080
          %v1153 = vadd.f32 %v1152, %v1081
          %v1154 = vadd.f32 %v1153, %v1082
          %v1155 = vadd.f32 %v1154, %v1083
          %v1156 = vadd.f32 %v1155, %v1084
          %1157 = vadd.xlane.f32.xlu0 %v1156
          %v1158 = vpop.xlane.xlu0 %1157
          %vm1159 = vcmask 7168
          %1160 = vst.msk [vmem:[%s423] sm:$0xff] %vm1159, %v1149
          %1161 = vst.msk [vmem:[%s423 + $0x8] sm:$0xff] %vm1159, %v1158
          %v1162 = vmul.f32 %v1069, %v1069
          %v1163 = vmul.f32 %v1070, %v1070
          %v1164 = vmul.f32 %v1071, %v1071
          %v1165 = vmul.f32 %v1072, %v1072
          %v1166 = vmul.f32 %v1073, %v1073
          %v1167 = vmul.f32 %v1074, %v1074
          %v1168 = vmul.f32 %v1075, %v1075
          %v1169 = vmul.f32 %v1076, %v1076
          %v1170 = vmul.f32 %v1077, %v1077
          %v1171 = vmul.f32 %v1078, %v1078
          %v1172 = vmul.f32 %v1079, %v1079
          %v1173 = vmul.f32 %v1080, %v1080
          %v1174 = vmul.f32 %v1081, %v1081
          %v1175 = vmul.f32 %v1082, %v1082
          %v1176 = vmul.f32 %v1083, %v1083
          %v1177 = vmul.f32 %v1084, %v1084
          %v1178 = vadd.f32 %v1162, %v1163
          %v1179 = vadd.f32 %v1178, %v1164
          %v1180 = vadd.f32 %v1179, %v1165
          %v1181 = vadd.f32 %v1180, %v1166
          %v1182 = vadd.f32 %v1181, %v1167
          %v1183 = vadd.f32 %v1182, %v1168
          %v1184 = vadd.f32 %v1183, %v1169
          %1185 = vadd.xlane.f32.xlu0 %v1184
          %v1186 = vpop.xlane.xlu0 %1185
          %v1187 = vadd.f32 %v1170, %v1171
          %v1188 = vadd.f32 %v1187, %v1172
          %v1189 = vadd.f32 %v1188, %v1173
          %v1190 = vadd.f32 %v1189, %v1174
          %v1191 = vadd.f32 %v1190, %v1175
          %v1192 = vadd.f32 %v1191, %v1176
          %v1193 = vadd.f32 %v1192, %v1177
          %1194 = vadd.xlane.f32.xlu0 %v1193
          %v1195 = vpop.xlane.xlu0 %1194
          %1196 = vst.msk [vmem:[%s432] sm:$0xff] %vm1159, %v1186
          %1197 = vst.msk [vmem:[%s432 + $0x8] sm:$0xff] %vm1159, %v1195
        $region59: #{basic_conv3d_forward.2} parent=46 // pred_fallthru
          _
        %s1198 = sand.u32 %s101, 1
        %s1199 = sand.u32 %s101, 1
        %s1200 = smul.addr %s1199, 64
        %s1201 = scalar_lea.vmem [#allocation4], %s1200
        %p1202 = scmp.lt.s32.totalorder %s21, 1
        %s1203 = scalar_select %p1202, %s21, 1
        %p1204 = scmp.lt.s32.totalorder %s22, 1
        %s1205 = scalar_select %p1204, %s22, 1
        %s1206 = smul.addr %s1205, 2
        %s1207 = smul.addr %s1203, 4
        %s1208 = sadd.s32 %s1206, %s1207
        %s1209 = smul.addr %s1208, 8
        %s1210 = scalar_lea.vmem %s3, %s1209
        %p1211 = scmp.lt.s32.totalorder %s21, 1
        %s1212 = scalar_select %p1211, %s21, 1
        %p1213 = scmp.lt.s32.totalorder %s22, 1
        %s1214 = scalar_select %p1213, %s22, 1
        %s1215 = smul.addr %s1214, 2
        %s1216 = smul.addr %s1212, 4
        %s1217 = sadd.s32 %s1215, %s1216
        %s1218 = smul.addr %s1217, 8
        %s1219 = scalar_lea.vmem %s4, %s1218
        // Predicated region
        $region60: #{basic_conv3d_forward.2} parent=46 // pred_check
          %p1220 = pneg %p111
        $region61: #{basic_conv3d_forward.2} parent=46 // pred_check_branch
          %1222 = sbr.rel (%p1220) target = $region63
        $region62: #{basic_conv3d_forward.2} parent=46 // pred_region
          %s1223 = smul.u32 8, %s22
          %s1224 = smul.addr %s21, 32
          %s1225 = sadd.s32 %s1223, %s1224
          %s1226 = smul.addr %s1225, 4
          %s1227 = scalar_lea.vmem %s2, %s1226
          // Predicated region
          $region64: #{basic_conv3d_forward.2} parent=62 // pred_check
            _
          $region65: #{basic_conv3d_forward.2} parent=62 // pred_check_branch
            %1229 = sbr.rel (0) target = $region67
          $region66: #{basic_conv3d_forward.2} parent=62 // pred_region
            // Predicated region
            $region68: #{basic_conv3d_forward.2} parent=66 // pred_check
              _
            $region69: #{basic_conv3d_forward.2} parent=66 // pred_check_branch
              %1231 = sbr.rel (0) target = $region71
            $region70: #{basic_conv3d_forward.2} parent=66 // pred_region
              loop: start=0, step=1, limit=1
              $region72: #{basic_conv3d_forward.2} parent=70 // loop_pre_header
                _
              $region73: #{basic_conv3d_forward.2} parent=70 // loop_header
                %s1233 = sphi 0, %s1237
                %p1234 = scmp.ge.s32.totalorder %s1233, 1
                %s1238 = sphi %s1201, %s1201
                %s1239 = sphi %s1227, %s1227
              $region74: #{basic_conv3d_forward.2} parent=70 // loop_header_branch
                %1236 = sbr.rel (%p1234) target = $region78
              $region75: #{basic_conv3d_forward.2} parent=70 // loop_body
                %v1240 = vld [vmem:[%s1238] sm:$0xff]
                %1241 = vst [vmem:[%s1239] sm:$0xff] %v1240
                %v1242 = vld [vmem:[%s1238 + $0x8] sm:$0xff]
                %1243 = vst [vmem:[%s1239 + $0x8] sm:$0xff] %v1242
                %v1244 = vld [vmem:[%s1238 + $0x10] sm:$0xff]
                %1245 = vst [vmem:[%s1239 + $0x10] sm:$0xff] %v1244
                %v1246 = vld [vmem:[%s1238 + $0x18] sm:$0xff]
                %1247 = vst [vmem:[%s1239 + $0x18] sm:$0xff] %v1246
                %v1248 = vld [vmem:[%s1238 + $0x20] sm:$0xff]
                %1249 = vst [vmem:[%s1239 + $0x40] sm:$0xff] %v1248
                %v1250 = vld [vmem:[%s1238 + $0x28] sm:$0xff]
                %1251 = vst [vmem:[%s1239 + $0x48] sm:$0xff] %v1250
                %v1252 = vld [vmem:[%s1238 + $0x30] sm:$0xff]
                %1253 = vst [vmem:[%s1239 + $0x50] sm:$0xff] %v1252
                %v1254 = vld [vmem:[%s1238 + $0x38] sm:$0xff]
                %1255 = vst [vmem:[%s1239 + $0x58] sm:$0xff] %v1254
              $region76: #{basic_conv3d_forward.2} parent=70 // loop_footer
                %s1237 = sadd.s32 1, %s1233
              $region77: #{basic_conv3d_forward.2} parent=70 // loop_footer_branch
                %1232 = sbr.rel target = $region73
              $region78: #{basic_conv3d_forward.2} parent=70 // loop_exit
                _
            $region71: #{basic_conv3d_forward.2} parent=66 // pred_fallthru
              _
            // Predicated region
            $region79: #{basic_conv3d_forward.2} parent=66 // pred_check
              _
            $region80: #{basic_conv3d_forward.2} parent=66 // pred_check_branch
              %1257 = sbr.rel target = $region82
            $region81: #{basic_conv3d_forward.2} parent=66 // pred_region
              _
            $region82: #{basic_conv3d_forward.2} parent=66 // pred_fallthru
              _
          $region67: #{basic_conv3d_forward.2} parent=62 // pred_fallthru
            _
          %1258 = vnop
        $region63: #{basic_conv3d_forward.2} parent=46 // pred_fallthru
          _
        // Predicated region
        $region83: #{basic_conv3d_forward.2} parent=46 // pred_check
          %p1259 = pneg %p139
        $region84: #{basic_conv3d_forward.2} parent=46 // pred_check_branch
          %1261 = sbr.rel (%p1259) target = $region86
        $region85: #{basic_conv3d_forward.2} parent=46 // pred_region
          _
        $region86: #{basic_conv3d_forward.2} parent=46 // pred_fallthru
          _
        // Predicated region
        $region87: #{basic_conv3d_forward.2} parent=46 // pred_check
          %p1262 = pneg %p167
        $region88: #{basic_conv3d_forward.2} parent=46 // pred_check_branch
          %1264 = sbr.rel (%p1262) target = $region90
        $region89: #{basic_conv3d_forward.2} parent=46 // pred_region
          _
        $region90: #{basic_conv3d_forward.2} parent=46 // pred_fallthru
          _
      $region47: #{basic_conv3d_forward.2} parent=5 // pred_fallthru
        _
      %p1265 = scmp.le.s32.totalorder 2, %s11
      // Predicated region
      $region91: #{basic_conv3d_forward.2} parent=5 // pred_check
        %p1266 = pneg %p1265
      $region92: #{basic_conv3d_forward.2} parent=5 // pred_check_branch
        %1268 = sbr.rel (%p1266) target = $region94
      $region93: #{basic_conv3d_forward.2} parent=5 // pred_region
        %s1269 = ssub.s32 %s11, 2
        // Predicated region
        $region95: #{basic_conv3d_forward.2} parent=93 // pred_check
          %p1270 = pneg %p117
        $region96: #{basic_conv3d_forward.2} parent=93 // pred_check_branch
          %1272 = sbr.rel (%p1270) target = $region98
        $region97: #{basic_conv3d_forward.2} parent=93 // pred_region
          %s1273 = sand.u32 %s102, 1
          %s1274 = sand.u32 %s102, 1
          %s1275 = smul.addr %s1274, 64
          %s1276 = scalar_lea.vmem [#allocation4], %s1275
        $region98: #{basic_conv3d_forward.2} parent=93 // pred_fallthru
          _
        // Predicated region
        $region99: #{basic_conv3d_forward.2} parent=93 // pred_check
          %p1277 = pneg %p145
        $region100: #{basic_conv3d_forward.2} parent=93 // pred_check_branch
          %1279 = sbr.rel (%p1277) target = $region102
        $region101: #{basic_conv3d_forward.2} parent=93 // pred_region
          %p1280 = scmp.lt.s32.totalorder %s24, 1
          %s1281 = scalar_select %p1280, %s24, 1
          %p1282 = scmp.lt.s32.totalorder %s25, 1
          %s1283 = scalar_select %p1282, %s25, 1
          %s1284 = smul.addr %s1283, 2
          %s1285 = smul.addr %s1281, 4
          %s1286 = sadd.s32 %s1284, %s1285
          %s1287 = smul.addr %s1286, 8
          %s1288 = scalar_lea.vmem %s3, %s1287
        $region102: #{basic_conv3d_forward.2} parent=93 // pred_fallthru
          _
        // Predicated region
        $region103: #{basic_conv3d_forward.2} parent=93 // pred_check
          %p1289 = pneg %p173
        $region104: #{basic_conv3d_forward.2} parent=93 // pred_check_branch
          %1291 = sbr.rel (%p1289) target = $region106
        $region105: #{basic_conv3d_forward.2} parent=93 // pred_region
          %p1292 = scmp.lt.s32.totalorder %s24, 1
          %s1293 = scalar_select %p1292, %s24, 1
          %p1294 = scmp.lt.s32.totalorder %s25, 1
          %s1295 = scalar_select %p1294, %s25, 1
          %s1296 = smul.addr %s1295, 2
          %s1297 = smul.addr %s1293, 4
          %s1298 = sadd.s32 %s1296, %s1297
          %s1299 = smul.addr %s1298, 8
          %s1300 = scalar_lea.vmem %s4, %s1299
        $region106: #{basic_conv3d_forward.2} parent=93 // pred_fallthru
          _
      $region94: #{basic_conv3d_forward.2} parent=5 // pred_fallthru
        _
    $region6: #{basic_conv3d_forward.2} parent=1 // loop_footer
      %s15 = sadd.s32 1, %s11
    $region7: #{basic_conv3d_forward.2} parent=1 // loop_footer_branch
      %10 = sbr.rel target = $region3
    $region8: #{basic_conv3d_forward.2} parent=1 // loop_exit
      _

// kernel: basic_conv3d_forward.3
$region0: #{basic_conv3d_forward.3}
  #allocation0 [shape = 'u32[]', space=smem, size = 0x4, offset = 0x4, fixed_abs, tag = 'smem constant byte address 0x4 - core index']
  #allocation1 [shape = 'u32[144,128]{1,0:T(1,128)}', space=vmem, size = 0x12000, scoped, tag = 'internal scratch']
  %s0 = inlined_call_operand.vmem [shape: bf16[2,16,2048], index: 0, kind: input, shape index: {}]
  %s1 = inlined_call_operand.vmem [shape: f32[8,1], index: 1, kind: input, shape index: {}]
  %s2 = inlined_call_operand.vmem [shape: f32[8,1], index: 2, kind: input, shape index: {}]
  %s3 = inlined_call_operand.vmem [shape: f32[2,8,2048], index: 3, kind: output, shape index: {}]
  %s4 = sld [smem:[#allocation0]]
  $region45: #{basic_conv3d_forward.3} parent=0
    _
  %s6 = ssub.s32 1, %s4
  %s7 = scalar_select 0, %s6, %s4
  loop: start=0, step=1, limit=4
  $region2: #{basic_conv3d_forward.3} parent=0 // loop_pre_header
    _
  $region3: #{basic_conv3d_forward.3} parent=0 // loop_header
    %s9 = sphi 0, %s13
    %p10 = scmp.ge.s32.totalorder %s9, 4
    %s16 = sphi 0, %s28
    %s17 = sphi 0, %s24
    %s18 = sphi 0, %s16
    %s19 = sphi 0, %s17
    %s20 = sphi 0, %s18
    %s21 = sphi 0, %s19
    %s33 = sphi 0, %s35
    %s36 = sphi 0, %s33
    %s37 = sphi 0, %s36
    %s53 = sphi 0, %s37
    %s57 = sphi 0, %s57
    %s59 = sphi 0, %s57
    %s60 = sphi 0, %s59
    %s74 = sphi 0, %s60
    %s78 = sphi 0, %s78
    %s80 = sphi 0, %s78
    %s81 = sphi 0, %s80
    %s95 = sphi 0, %s81
    %s103 = sphi 0, %s105
    %s106 = sphi 0, %s103
    %s107 = sphi 0, %s106
    %s123 = sphi 0, %s107
  $region4: #{basic_conv3d_forward.3} parent=0 // loop_header_branch
    %12 = sbr.rel (%p10) target = $region8
  $region5: #{basic_conv3d_forward.3} parent=0 // loop_body
    %s14 = ssub.s32 %s9, 1
    %s15 = ssub.s32 %s9, 2
    %s22 = sadd.s32 1, %s17
    %p23 = scmp.ge.s32.totalorder %s22, 1
    %s24 = scalar_select %p23, 0, %s22
    %s25 = sadd.s32 1, %s16
    %s26 = scalar_select %p23, %s25, %s16
    %p27 = scmp.ge.s32.totalorder %s26, 2
    %s28 = scalar_select %p27, 0, %s26
    %s29 = ssub.s32 %s16, %s28
    %s30 = ssub.s32 %s17, %s24
    %s31 = sor.u32 %s29, %s30
    %p32 = scmp.eq.s32.totalorder %s31, 0
    %s34 = sadd.s32 %s33, 1
    %s35 = scalar_select %p32, %s33, %s34
    %p38 = pneg %p32
    %p39 = scmp.eq.s32.totalorder %s9, 1
    %p40 = por %p38, %p39
    %p41 = scmp.ne.s32.totalorder %s33, %s36
    %p42 = scmp.eq.s32.totalorder %s9, 0
    %p43 = por %p41, %p42
    %p44 = scmp.ne.s32.totalorder %s33, %s36
    %p45 = scmp.eq.s32.totalorder %s14, 1
    %p46 = por %p44, %p45
    %p47 = scmp.ne.s32.totalorder %s36, %s37
    %p48 = scmp.eq.s32.totalorder %s14, 0
    %p49 = por %p47, %p48
    %p50 = scmp.ne.s32.totalorder %s36, %s37
    %p51 = scmp.eq.s32.totalorder %s15, 1
    %p52 = por %p50, %p51
    %p54 = scmp.ne.s32.totalorder %s37, %s53
    %p55 = scmp.eq.s32.totalorder %s15, 0
    %p56 = por %p54, %p55
    %s58 = sadd.s32 %s57, 1
    %p61 = scmp.eq.s32.totalorder %s9, 1
    %p62 = scmp.ne.s32.totalorder %s57, %s59
    %p63 = scmp.eq.s32.totalorder %s9, 0
    %p64 = por %p62, %p63
    %p65 = scmp.ne.s32.totalorder %s57, %s59
    %p66 = scmp.eq.s32.totalorder %s14, 1
    %p67 = por %p65, %p66
    %p68 = scmp.ne.s32.totalorder %s59, %s60
    %p69 = scmp.eq.s32.totalorder %s14, 0
    %p70 = por %p68, %p69
    %p71 = scmp.ne.s32.totalorder %s59, %s60
    %p72 = scmp.eq.s32.totalorder %s15, 1
    %p73 = por %p71, %p72
    %p75 = scmp.ne.s32.totalorder %s60, %s74
    %p76 = scmp.eq.s32.totalorder %s15, 0
    %p77 = por %p75, %p76
    %s79 = sadd.s32 %s78, 1
    %p82 = scmp.eq.s32.totalorder %s9, 1
    %p83 = scmp.ne.s32.totalorder %s78, %s80
    %p84 = scmp.eq.s32.totalorder %s9, 0
    %p85 = por %p83, %p84
    %p86 = scmp.ne.s32.totalorder %s78, %s80
    %p87 = scmp.eq.s32.totalorder %s14, 1
    %p88 = por %p86, %p87
    %p89 = scmp.ne.s32.totalorder %s80, %s81
    %p90 = scmp.eq.s32.totalorder %s14, 0
    %p91 = por %p89, %p90
    %p92 = scmp.ne.s32.totalorder %s80, %s81
    %p93 = scmp.eq.s32.totalorder %s15, 1
    %p94 = por %p92, %p93
    %p96 = scmp.ne.s32.totalorder %s81, %s95
    %p97 = scmp.eq.s32.totalorder %s15, 0
    %p98 = por %p96, %p97
    %s99 = ssub.s32 %s16, %s28
    %s100 = ssub.s32 %s17, %s24
    %s101 = sor.u32 %s99, %s100
    %p102 = scmp.eq.s32.totalorder %s101, 0
    %s104 = sadd.s32 %s103, 1
    %s105 = scalar_select %p102, %s103, %s104
    %p108 = pneg %p102
    %p109 = scmp.eq.s32.totalorder %s9, 1
    %p110 = por %p108, %p109
    %p111 = scmp.ne.s32.totalorder %s103, %s106
    %p112 = scmp.eq.s32.totalorder %s9, 0
    %p113 = por %p111, %p112
    %p114 = scmp.ne.s32.totalorder %s103, %s106
    %p115 = scmp.eq.s32.totalorder %s14, 1
    %p116 = por %p114, %p115
    %p117 = scmp.ne.s32.totalorder %s106, %s107
    %p118 = scmp.eq.s32.totalorder %s14, 0
    %p119 = por %p117, %p118
    %p120 = scmp.ne.s32.totalorder %s106, %s107
    %p121 = scmp.eq.s32.totalorder %s15, 1
    %p122 = por %p120, %p121
    %p124 = scmp.ne.s32.totalorder %s107, %s123
    %p125 = scmp.eq.s32.totalorder %s15, 0
    %p126 = por %p124, %p125
    %p127 = scmp.le.s32.totalorder 1, %s9
    %p128 = scmp.lt.s32.totalorder %s9, 3
    %p129 = pnand %p127, %p128
    %p130 = pneg %p129
    // Predicated region
    $region9: #{basic_conv3d_forward.3} parent=5 // pred_check
      _
    $region10: #{basic_conv3d_forward.3} parent=5 // pred_check_branch
      %132 = sbr.rel (%p129) target = $region12
    $region11: #{basic_conv3d_forward.3} parent=5 // pred_region
      %s133 = ssub.s32 %s9, 1
      // Predicated region
      $region13: #{basic_conv3d_forward.3} parent=11 // pred_check
        %p134 = pneg %p70
      $region14: #{basic_conv3d_forward.3} parent=11 // pred_check_branch
        %136 = sbr.rel (%p134) target = $region16
      $region15: #{basic_conv3d_forward.3} parent=11 // pred_region
        _
      $region16: #{basic_conv3d_forward.3} parent=11 // pred_fallthru
        _
      // Predicated region
      $region17: #{basic_conv3d_forward.3} parent=11 // pred_check
        %p137 = pneg %p91
      $region18: #{basic_conv3d_forward.3} parent=11 // pred_check_branch
        %139 = sbr.rel (%p137) target = $region20
      $region19: #{basic_conv3d_forward.3} parent=11 // pred_region
        _
      $region20: #{basic_conv3d_forward.3} parent=11 // pred_fallthru
        _
    $region12: #{basic_conv3d_forward.3} parent=5 // pred_fallthru
      _
    %p140 = scmp.lt.s32.totalorder %s9, 2
    // Predicated region
    $region21: #{basic_conv3d_forward.3} parent=5 // pred_check
      %p141 = pneg %p140
    $region22: #{basic_conv3d_forward.3} parent=5 // pred_check_branch
      %143 = sbr.rel (%p141) target = $region24
    $region23: #{basic_conv3d_forward.3} parent=5 // pred_region
      // Predicated region
      $region25: #{basic_conv3d_forward.3} parent=23 // pred_check
        %p144 = pneg %p43
      $region26: #{basic_conv3d_forward.3} parent=23 // pred_check_branch
        %146 = sbr.rel (%p144) target = $region28
      $region27: #{basic_conv3d_forward.3} parent=23 // pred_region
        %s147 = smul.u32 16, %s17
        %p148 = scmp.lt.s32.totalorder %s16, 1
        %s149 = scalar_select %p148, %s16, 1
        %p150 = scmp.lt.s32.totalorder %s147, 15
        %s151 = scalar_select %p150, %s147, 15
        %s152 = smul.addr %s149, 32
        %s153 = sadd.s32 %s151, %s152
        %s154 = smul.addr %s153, 4
        %s155 = scalar_lea.vmem %s0, %s154
        %s156 = smul.u32 16, %s17
      $region28: #{basic_conv3d_forward.3} parent=23 // pred_fallthru
        _
    $region24: #{basic_conv3d_forward.3} parent=5 // pred_fallthru
      _
    %p157 = scmp.le.s32.totalorder 1, %s9
    %p158 = scmp.lt.s32.totalorder %s9, 3
    %p159 = pnand %p157, %p158
    %p160 = pneg %p159
    // Predicated region
    $region29: #{basic_conv3d_forward.3} parent=5 // pred_check
      _
    $region30: #{basic_conv3d_forward.3} parent=5 // pred_check_branch
      %162 = sbr.rel (%p159) target = $region32
    $region31: #{basic_conv3d_forward.3} parent=5 // pred_region
      %s163 = ssub.s32 %s9, 1
      %s164 = smul.u32 16, %s19
      %p165 = scmp.lt.s32.totalorder %s18, 1
      %s166 = scalar_select %p165, %s18, 1
      %p167 = scmp.lt.s32.totalorder %s164, 15
      %s168 = scalar_select %p167, %s164, 15
      %s169 = smul.addr %s166, 32
      %s170 = sadd.s32 %s168, %s169
      %s171 = smul.addr %s170, 4
      %s172 = scalar_lea.vmem %s0, %s171
      %p173 = pneg %p49
      %p174 = pneg %p46
      %p175 = pneg %p70
      %p176 = pneg %p67
      %p177 = pneg %p91
      %p178 = pneg %p88
      %p179 = pneg %p119
      %p180 = pneg %p116
      %s181 = smul.u32 16, %s19
      %p182 = scmp.lt.s32.totalorder %s18, 1
      %s183 = scalar_select %p182, %s18, 1
      %p184 = scmp.lt.s32.totalorder %s181, 15
      %s185 = scalar_select %p184, %s181, 15
      %s186 = smul.addr %s183, 16
      %s187 = sadd.s32 %s185, %s186
      %s188 = smul.addr %s187, 8
      %s189 = scalar_lea.vmem %s3, %s188
      %s190 = smul.u32 16, %s19
      %p191 = scmp.lt.s32.totalorder %s18, 1
      %s192 = scalar_select %p191, %s18, 1
      %p193 = scmp.lt.s32.totalorder %s190, 15
      %s194 = scalar_select %p193, %s190, 15
      %s195 = smul.addr %s192, 32
      %s196 = sadd.s32 %s194, %s195
      %s197 = smul.addr %s196, 4
      %s198 = scalar_lea.vmem %s0, %s197
      %s199 = smul.u32 16, %s19
      %s200 = smul.u32 16, %s19
      %p201 = scmp.lt.s32.totalorder %s18, 1
      %s202 = scalar_select %p201, %s18, 1
      %p203 = scmp.lt.s32.totalorder %s200, 15
      %s204 = scalar_select %p203, %s200, 15
      %s205 = smul.addr %s202, 16
      %s206 = sadd.s32 %s204, %s205
      %s207 = smul.addr %s206, 8
      %s208 = scalar_lea.vmem %s3, %s207
      %s209 = smul.u32 16, %s19
      %v210 = vld [vmem:[%s198] sm:$0xff]
      %v211 = vld [vmem:[%s198 + $0x8] sm:$0xff]
      %v212 = vld [vmem:[%s198 + $0x10] sm:$0xff]
      %v213 = vld [vmem:[%s198 + $0x18] sm:$0xff]
      %v214 = vld [vmem:[%s198 + $0x20] sm:$0xff]
      %v215 = vld [vmem:[%s198 + $0x28] sm:$0xff]
      %v216 = vld [vmem:[%s198 + $0x30] sm:$0xff]
      %v217 = vld [vmem:[%s198 + $0x38] sm:$0xff]
      %v218 = vunpack.c.l.bf16 %v210
      %v219 = vunpack.c.h.bf16 %v210
      %v220 = vunpack.c.l.bf16 %v211
      %v221 = vunpack.c.h.bf16 %v211
      %v222 = vunpack.c.l.bf16 %v212
      %v223 = vunpack.c.h.bf16 %v212
      %v224 = vunpack.c.l.bf16 %v213
      %v225 = vunpack.c.h.bf16 %v213
      %v226 = vunpack.c.l.bf16 %v214
      %v227 = vunpack.c.h.bf16 %v214
      %v228 = vunpack.c.l.bf16 %v215
      %v229 = vunpack.c.h.bf16 %v215
      %v230 = vunpack.c.l.bf16 %v216
      %v231 = vunpack.c.h.bf16 %v216
      %v232 = vunpack.c.l.bf16 %v217
      %v233 = vunpack.c.h.bf16 %v217
      %v234 = vld [vmem:[%s1] sm:$0xff]
      %236 = vset.pattern.permute.xlu0 0
      %237 = vperm.xlu0 %236, %v234
      %v238 = vpop.permute.xlu0 %237
      %v240 = vmul.f32 %v218, %v238
      %v241 = vmul.f32 %v219, %v238
      %v242 = vmul.f32 %v220, %v238
      %v243 = vmul.f32 %v221, %v238
      %v244 = vmul.f32 %v222, %v238
      %v245 = vmul.f32 %v223, %v238
      %v246 = vmul.f32 %v224, %v238
      %v247 = vmul.f32 %v225, %v238
      %v248 = vmul.f32 %v226, %v238
      %v249 = vmul.f32 %v227, %v238
      %v250 = vmul.f32 %v228, %v238
      %v251 = vmul.f32 %v229, %v238
      %v252 = vmul.f32 %v230, %v238
      %v253 = vmul.f32 %v231, %v238
      %v254 = vmul.f32 %v232, %v238
      %v255 = vmul.f32 %v233, %v238
      %v256 = vld [vmem:[%s2] sm:$0xff]
      %258 = vset.pattern.permute.xlu0 0
      %259 = vperm.xlu0 %258, %v256
      %v260 = vpop.permute.xlu0 %259
      %v262 = vadd.f32 %v240, %v260
      %v263 = vadd.f32 %v241, %v260
      %v264 = vadd.f32 %v242, %v260
      %v265 = vadd.f32 %v243, %v260
      %v266 = vadd.f32 %v244, %v260
      %v267 = vadd.f32 %v245, %v260
      %v268 = vadd.f32 %v246, %v260
      %v269 = vadd.f32 %v247, %v260
      %v270 = vadd.f32 %v248, %v260
      %v271 = vadd.f32 %v249, %v260
      %v272 = vadd.f32 %v250, %v260
      %v273 = vadd.f32 %v251, %v260
      %v274 = vadd.f32 %v252, %v260
      %v275 = vadd.f32 %v253, %v260
      %v276 = vadd.f32 %v254, %v260
      %v277 = vadd.f32 %v255, %v260
      %v278 = vmax.f32 %v262, 0.0
      %v279 = vmax.f32 %v263, 0.0
      %v280 = vmax.f32 %v264, 0.0
      %v281 = vmax.f32 %v265, 0.0
      %v282 = vmax.f32 %v266, 0.0
      %v283 = vmax.f32 %v267, 0.0
      %v284 = vmax.f32 %v268, 0.0
      %v285 = vmax.f32 %v269, 0.0
      %v286 = vmax.f32 %v270, 0.0
      %v287 = vmax.f32 %v271, 0.0
      %v288 = vmax.f32 %v272, 0.0
      %v289 = vmax.f32 %v273, 0.0
      %v290 = vmax.f32 %v274, 0.0
      %v291 = vmax.f32 %v275, 0.0
      %v292 = vmax.f32 %v276, 0.0
      %v293 = vmax.f32 %v277, 0.0
      %294 = vst [vmem:[%s208] sm:$0xff] %v278
      %295 = vst [vmem:[%s208 + $0x8] sm:$0xff] %v279
      %296 = vst [vmem:[%s208 + $0x10] sm:$0xff] %v280
      %297 = vst [vmem:[%s208 + $0x18] sm:$0xff] %v281
      %298 = vst [vmem:[%s208 + $0x20] sm:$0xff] %v282
      %299 = vst [vmem:[%s208 + $0x28] sm:$0xff] %v283
      %300 = vst [vmem:[%s208 + $0x30] sm:$0xff] %v284
      %301 = vst [vmem:[%s208 + $0x38] sm:$0xff] %v285
      %302 = vst [vmem:[%s208 + $0x40] sm:$0xff] %v286
      %303 = vst [vmem:[%s208 + $0x48] sm:$0xff] %v287
      %304 = vst [vmem:[%s208 + $0x50] sm:$0xff] %v288
      %305 = vst [vmem:[%s208 + $0x58] sm:$0xff] %v289
      %306 = vst [vmem:[%s208 + $0x60] sm:$0xff] %v290
      %307 = vst [vmem:[%s208 + $0x68] sm:$0xff] %v291
      %308 = vst [vmem:[%s208 + $0x70] sm:$0xff] %v292
      %309 = vst [vmem:[%s208 + $0x78] sm:$0xff] %v293
      %s310 = smul.u32 16, %s19
      %p311 = scmp.lt.s32.totalorder %s18, 1
      %s312 = scalar_select %p311, %s18, 1
      %p313 = scmp.lt.s32.totalorder %s310, 15
      %s314 = scalar_select %p313, %s310, 15
      %s315 = smul.addr %s312, 16
      %s316 = sadd.s32 %s314, %s315
      %s317 = smul.addr %s316, 8
      %s318 = scalar_lea.vmem %s3, %s317
      // Predicated region
      $region33: #{basic_conv3d_forward.3} parent=31 // pred_check
        %p319 = pneg %p116
      $region34: #{basic_conv3d_forward.3} parent=31 // pred_check_branch
        %321 = sbr.rel (%p319) target = $region36
      $region35: #{basic_conv3d_forward.3} parent=31 // pred_region
        %s322 = smul.u32 16, %s19
      $region36: #{basic_conv3d_forward.3} parent=31 // pred_fallthru
        _
    $region32: #{basic_conv3d_forward.3} parent=5 // pred_fallthru
      _
    %p323 = scmp.le.s32.totalorder 2, %s9
    // Predicated region
    $region37: #{basic_conv3d_forward.3} parent=5 // pred_check
      %p324 = pneg %p323
    $region38: #{basic_conv3d_forward.3} parent=5 // pred_check_branch
      %326 = sbr.rel (%p324) target = $region40
    $region39: #{basic_conv3d_forward.3} parent=5 // pred_region
      %s327 = ssub.s32 %s9, 2
      // Predicated region
      $region41: #{basic_conv3d_forward.3} parent=39 // pred_check
        %p328 = pneg %p122
      $region42: #{basic_conv3d_forward.3} parent=39 // pred_check_branch
        %330 = sbr.rel (%p328) target = $region44
      $region43: #{basic_conv3d_forward.3} parent=39 // pred_region
        %s331 = smul.u32 16, %s21
        %p332 = scmp.lt.s32.totalorder %s20, 1
        %s333 = scalar_select %p332, %s20, 1
        %p334 = scmp.lt.s32.totalorder %s331, 15
        %s335 = scalar_select %p334, %s331, 15
        %s336 = smul.addr %s333, 16
        %s337 = sadd.s32 %s335, %s336
        %s338 = smul.addr %s337, 8
        %s339 = scalar_lea.vmem %s3, %s338
      $region44: #{basic_conv3d_forward.3} parent=39 // pred_fallthru
        _
    $region40: #{basic_conv3d_forward.3} parent=5 // pred_fallthru
      _
  $region6: #{basic_conv3d_forward.3} parent=0 // loop_footer
    %s13 = sadd.s32 1, %s9
  $region7: #{basic_conv3d_forward.3} parent=0 // loop_footer_branch
    %8 = sbr.rel target = $region3
  $region8: #{basic_conv3d_forward.3} parent=0 // loop_exit
    _

</llo_original>
